<compile_context>
chip_gen: v7x
topology: tpu7x:2x2x1
jax: 0.10.0
libtpu: 0.0.40
codegen_flags: <defaults>
</compile_context>

<pallas_src>
from functools import partial

import numpy as np
import jax
import jax.numpy as jnp
from jax.experimental import pallas as pl
from jax.experimental.pallas import tpu as pltpu


def _lif_update(v_ref, x, thresh, out_dtype):
    """One MultiStepLIFNode step (tau=2, v_reset=0, decay_input=True, hard reset)."""
    v_prev = v_ref[...]
    v = v_prev + (x - v_prev) * 0.5
    spiked = v >= thresh
    v_ref[...] = jnp.where(spiked, 0.0, v)          # hard reset to 0 where spiked
    return spiked.astype(out_dtype)


def ssa_sp_kernel(x_ref, wqkv_ref, bqkv_ref, wp_ref, bp_ref, out_ref,
                  v_qkv, v_att, v_prj, *, num_heads, n_per_batch):
    t = pl.program_id(1)

    # reset all LIF membranes at the first time step of this batch block
    @pl.when(t == 0)
    def _init():
        v_qkv[...] = jnp.zeros_like(v_qkv)
        v_att[...] = jnp.zeros_like(v_att)
        v_prj[...] = jnp.zeros_like(v_prj)

    x = x_ref[0]                                    # [C, L] bf16, L = bb * N (lane dense)
    C, L = x.shape
    N = n_per_batch
    bb = L // N                                     # batches handled by this block
    Ch = C // num_heads

    # ---- fused q/k/v 1x1 conv + folded BN: one [3C, C] @ [C, L] MXU matmul ------------
    qkv = jnp.dot(wqkv_ref[...], x, preferred_element_type=jnp.float32) + bqkv_ref[...]
    qkv_spk = _lif_update(v_qkv, qkv, 1.0, jnp.bfloat16)        # [3C, L] spikes in {0,1}

    q3 = qkv_spk[0 * C:1 * C].reshape(num_heads, Ch, L)         # sublane-aligned slices
    k3 = qkv_spk[1 * C:2 * C].reshape(num_heads, Ch, L)
    v3 = qkv_spk[2 * C:3 * C].reshape(num_heads, Ch, L)

    # ---- spiking self-attention: all heads batched in one einsum ----------------------
    # Per-batch separation via lane masks keeps everything at full lane width (no
    # 64-wide slices, no scratch assembly buffer).  Scale 0.125 folded into tiny kv.
    if bb > 1:
        lane = jax.lax.broadcasted_iota(jnp.int32, (1, 1, L), 2)
        masks = [((lane >= b * N) & (lane < (b + 1) * N)).astype(jnp.bfloat16)
                 for b in range(bb)]

    attn = None
    for b in range(bb):
        if bb > 1:
            kb, qb = k3 * masks[b], q3 * masks[b]   # spikes * {0,1} mask stay exact
        else:
            kb, qb = k3, q3
        # kv[h,d,c] = sum_n v[h,d,n] * k[h,c,n]   (sum restricted to batch b by mask)
        kv = jnp.einsum('hdn,hcn->hdc', v3, kb, preferred_element_type=jnp.float32)
        kv = (kv * 0.125).astype(jnp.bfloat16)
        # ah[h,d,n] = sum_c kv[h,d,c] * q[h,c,n]  (masked q zeroes other batches' lanes)
        ah = jnp.einsum('hdc,hcn->hdn', kv, qb,
                        preferred_element_type=jnp.float32).reshape(C, L)
        attn = ah if attn is None else attn + ah

    attn_spk = _lif_update(v_att, attn, 0.5, jnp.bfloat16)      # attn_lif, thr = 0.5

    # ---- proj 1x1 conv + folded BN + LIF -----------------------------------------------
    proj = jnp.dot(wp_ref[...], attn_spk, preferred_element_type=jnp.float32) + bp_ref[...]
    out_ref[0] = _lif_update(v_prj, proj, 1.0, out_ref.dtype)


def make_params(key, dim, num_heads):
    """Deterministic synthetic parameters; conv + eval-mode BN folded together."""
    del num_heads
    keys = jax.random.split(key, 5)

    def conv_w(k, co, ci):
        return jax.random.normal(k, (co, ci), jnp.float32) / np.sqrt(ci)

    def bn(c, phase):
        idx = jnp.arange(c, dtype=jnp.float32)
        gamma = 1.0 + 0.1 * jnp.cos(idx + phase)
        beta = 0.05 * jnp.sin(0.5 * idx + phase)
        mean = 0.02 * jnp.sin(0.3 * idx + phase)
        var = 1.0 + 0.1 * jnp.cos(0.7 * idx + phase) ** 2
        return gamma, beta, mean, var

    def fold(w, b_conv, bn_p, eps=1e-5):
        gamma, beta, mean, var = bn_p
        s = gamma / jnp.sqrt(var + eps)
        return w * s[:, None], beta + (b_conv - mean) * s

    zeros = jnp.zeros((dim,), jnp.float32)
    wq, bq = fold(conv_w(keys[0], dim, dim), zeros, bn(dim, 0.0))   # q_conv bias=False
    wk, bk = fold(conv_w(keys[1], dim, dim), zeros, bn(dim, 1.0))   # k_conv bias=False
    wv, bv = fold(conv_w(keys[2], dim, dim), zeros, bn(dim, 2.0))   # v_conv bias=False
    wp, bp = fold(conv_w(keys[3], dim, dim),
                  0.1 * jax.random.normal(keys[4], (dim,), jnp.float32), bn(dim, 3.0))
    # fuse q/k/v into one [3*dim, dim] weight -> one MXU pass, one weight DMA
    wqkv = jnp.concatenate([wq, wk, wv], axis=0)
    bqkv = jnp.concatenate([bq, bk, bv], axis=0)
    return dict(wqkv=wqkv, bqkv=bqkv, wp=wp, bp=bp)


def ssa_sp_forward(x, params, num_heads):
    T, B, C, H, W = x.shape
    assert C % num_heads == 0
    N = H * W
    L = B * N
    Ch = C // num_heads

    # lane-dense layout: [T, C, B*N]; bf16 matmul operands, f32 accumulation in-kernel
    xf = jnp.transpose(x.reshape(T, B, C, N), (0, 2, 1, 3)).reshape(T, C, L)
    xf = xf.astype(jnp.bfloat16)

    wqkv = params['wqkv'].astype(jnp.bfloat16)
    bqkv = params['bqkv'].reshape(-1, 1).astype(jnp.float32)
    wp = params['wp'].astype(jnp.bfloat16)
    bp = params['bp'].reshape(-1, 1).astype(jnp.float32)

    # split the batch into G parallel blocks while keeping each block lane-dense
    # (bb*N multiple of 128).  On megacore the "parallel" axis spreads over cores;
    # maximising G also minimises bb, i.e. minimises the masked-attention redundancy.
    G = 1
    for g in range(B, 0, -1):
        if B % g == 0 and ((B // g) * N) % 128 == 0:
            G = g
            break
    bb = B // G
    Lblk = bb * N

    flops_step = (2 * (3 * C) * C * Lblk          # fused qkv conv
                  + bb * 4 * C * Ch * Lblk        # attention (kv + apply)
                  + 2 * C * C * Lblk)             # proj conv
    cost = pl.CostEstimate(
        flops=int(flops_step) * G * T,
        transcendentals=0,
        bytes_accessed=int(T * C * L * 2          # bf16 input
                           + T * C * L * 2        # bf16 spike output
                           + (3 * C * C + C * C) * 2 + (3 * C + C) * 4))

    # explicit VMEM budget (fits v7x's 64 MiB; raised above v6e's 32 MiB scoped default
    # automatically when shapes grow)
    vmem_need = (2 * C * Lblk * (2 + 2)                       # double-buffered bf16 in/out
                 + (3 * C * C + C * C) * 2 + (3 * C + C) * 4  # resident weights + biases
                 + 5 * C * Lblk * 4)                          # LIF membrane scratch (f32)
    vmem_limit = int(min(48 * 2 ** 20, max(4 * vmem_need, 8 * 2 ** 20)))

    out = pl.pallas_call(
        partial(ssa_sp_kernel, num_heads=num_heads, n_per_batch=N),
        out_shape=jax.ShapeDtypeStruct((T, C, L), jnp.bfloat16),   # spikes are exact in bf16
        grid_spec=pltpu.PrefetchScalarGridSpec(
            num_scalar_prefetch=0,
            grid=(G, T),                                      # T innermost: LIF state carry
            in_specs=[
                pl.BlockSpec((1, C, Lblk), lambda g, t: (t, 0, g)),
                pl.BlockSpec((3 * C, C), lambda g, t: (0, 0)),
                pl.BlockSpec((3 * C, 1), lambda g, t: (0, 0)),
                pl.BlockSpec((C, C), lambda g, t: (0, 0)),
                pl.BlockSpec((C, 1), lambda g, t: (0, 0)),
            ],
            out_specs=pl.BlockSpec((1, C, Lblk), lambda g, t: (t, 0, g)),
            scratch_shapes=[
                pltpu.VMEM((3 * C, Lblk), jnp.float32),   # fused q/k/v LIF membranes
                pltpu.VMEM((C, Lblk), jnp.float32),       # attn_lif membrane
                pltpu.VMEM((C, Lblk), jnp.float32),       # proj_lif membrane
            ],
        ),
        compiler_params=pltpu.CompilerParams(
            dimension_semantics=("parallel", "arbitrary"),
            vmem_limit_bytes=vmem_limit),
        cost_estimate=cost,
    )(xf, wqkv, bqkv, wp, bp)

    out = out.reshape(T, C, B, N).transpose(0, 2, 1, 3).reshape(T, B, C, H, W)
    return out.astype(jnp.float32)                 # {0,1} spikes: bf16 -> f32 is lossless


if __name__ == "__main__":
    # TODO(synk): detach_reset / surrogate gradients are backward-only and not modeled.
    T, B, dim, H, W = 4, 2, 32, 8, 8
    num_heads = 4

    key = jax.random.PRNGKey(0)
    k_x, k_p = jax.random.split(key)
    x = jax.random.normal(k_x, (T, B, dim, H, W), jnp.float32)
    params = make_params(k_p, dim, num_heads)

    y = ssa_sp_forward(x, params, num_heads)
    y = jax.block_until_ready(y)

    assert y.shape == (T, B, dim, H, W), y.shape
    assert bool(jnp.all(jnp.isfinite(y)))
    # LIF output must be pure spikes
    assert bool(jnp.all((y == 0.0) | (y == 1.0)))
    print("KERNEL_OK")
</pallas_src>

<mosaic_0001>
module attributes {stable_mosaic.version = 11 : i64} {
  func.func @ssa_sp_kernel(%arg0: i32, %arg1: i32, %arg2: memref<1x32x128xbf16, #tpu.memory_space<vmem>>, %arg3: memref<96x32xbf16, #tpu.memory_space<vmem>>, %arg4: memref<96x1xf32, #tpu.memory_space<vmem>>, %arg5: memref<32x32xbf16, #tpu.memory_space<vmem>>, %arg6: memref<32x1xf32, #tpu.memory_space<vmem>>, %arg7: memref<1x32x128xbf16, #tpu.memory_space<vmem>>, %arg8: memref<96x128xf32, #tpu.memory_space<vmem>>, %arg9: memref<32x128xf32, #tpu.memory_space<vmem>>, %arg10: memref<32x128xf32, #tpu.memory_space<vmem>>) attributes {dimension_semantics = [#tpu.dimension_semantics<parallel>, #tpu.dimension_semantics<arbitrary>], iteration_bounds = array<i64: 1, 4>, scalar_prefetch = 0 : i64, scratch_operands = 3 : i64, tpu.core_type = #tpu.core_type<tc>, window_params = [{transform_indices = @transform_0, window_bounds = array<i64: 1, 32, 128>}, {pipeline_mode = #tpu.pipeline_mode<synchronous>, transform_indices = @transform_1, window_bounds = array<i64: 96, 32>}, {pipeline_mode = #tpu.pipeline_mode<synchronous>, transform_indices = @transform_2, window_bounds = array<i64: 96, 1>}, {pipeline_mode = #tpu.pipeline_mode<synchronous>, transform_indices = @transform_3, window_bounds = array<i64: 32, 32>}, {pipeline_mode = #tpu.pipeline_mode<synchronous>, transform_indices = @transform_4, window_bounds = array<i64: 32, 1>}, {transform_indices = @transform_5, window_bounds = array<i64: 1, 32, 128>}]} {
    %c0_i32 = arith.constant 0 : i32
    %0 = arith.cmpi eq, %arg1, %c0_i32 : i32
    %1 = arith.extui %0 : i1 to i32
    %c0_i32_0 = arith.constant 0 : i32
    %2 = arith.cmpi ne, %1, %c0_i32_0 : i32
    scf.if %2 {
      %cst_44 = arith.constant 0.000000e+00 : f32
      %101 = vector.broadcast %cst_44 : f32 to vector<96x128xf32>
      %c0_45 = arith.constant 0 : index
      %c0_46 = arith.constant 0 : index
      %102 = vector.load %arg8[%c0_45, %c0_46] : memref<96x128xf32, #tpu.memory_space<vmem>>, vector<96x128xf32>
      tpu.vector_store %arg8[%c0_45, %c0_46], %101 {strides = array<i32>} : memref<96x128xf32, #tpu.memory_space<vmem>>, vector<96x128xf32>,
      %cst_47 = arith.constant 0.000000e+00 : f32
      %103 = vector.broadcast %cst_47 : f32 to vector<32x128xf32>
      %c0_48 = arith.constant 0 : index
      %c0_49 = arith.constant 0 : index
      %104 = vector.load %arg9[%c0_48, %c0_49] : memref<32x128xf32, #tpu.memory_space<vmem>>, vector<32x128xf32>
      tpu.vector_store %arg9[%c0_48, %c0_49], %103 {strides = array<i32>} : memref<32x128xf32, #tpu.memory_space<vmem>>, vector<32x128xf32>,
      %cst_50 = arith.constant 0.000000e+00 : f32
      %105 = vector.broadcast %cst_50 : f32 to vector<32x128xf32>
      %c0_51 = arith.constant 0 : index
      %c0_52 = arith.constant 0 : index
      %106 = vector.load %arg10[%c0_51, %c0_52] : memref<32x128xf32, #tpu.memory_space<vmem>>, vector<32x128xf32>
      tpu.vector_store %arg10[%c0_51, %c0_52], %105 {strides = array<i32>} : memref<32x128xf32, #tpu.memory_space<vmem>>, vector<32x128xf32>,
    } else {
    }
    %c0 = arith.constant 0 : index
    %c0_1 = arith.constant 0 : index
    %c0_2 = arith.constant 0 : index
    %3 = vector.load %arg2[%c0, %c0_1, %c0_2] : memref<1x32x128xbf16, #tpu.memory_space<vmem>>, vector<1x32x128xbf16>
    %4 = vector.shape_cast %3 : vector<1x32x128xbf16> to vector<32x128xbf16>
    %c0_3 = arith.constant 0 : index
    %c0_4 = arith.constant 0 : index
    %5 = vector.load %arg3[%c0_3, %c0_4] : memref<96x32xbf16, #tpu.memory_space<vmem>>, vector<96x32xbf16>
    %cst = arith.constant dense<0.000000e+00> : vector<96x128xf32>
    %6 = tpu.matmul %5, %4, %cst {dimension_numbers = #tpu.dot_dimension_numbers<[1], [0], [0], [1], [0, 0, 1, 1], [], []>} : vector<96x32xbf16>, vector<32x128xbf16>, vector<96x128xf32> -> vector<96x128xf32>
    %c0_5 = arith.constant 0 : index
    %c0_6 = arith.constant 0 : index
    %7 = vector.load %arg4[%c0_5, %c0_6] : memref<96x1xf32, #tpu.memory_space<vmem>>, vector<96x1xf32>
    %8 = vector.broadcast %7 : vector<96x1xf32> to vector<96x128xf32>
    %9 = arith.addf %6, %8 : vector<96x128xf32>
    %c0_7 = arith.constant 0 : index
    %c0_8 = arith.constant 0 : index
    %10 = vector.load %arg8[%c0_7, %c0_8] : memref<96x128xf32, #tpu.memory_space<vmem>>, vector<96x128xf32>
    %11 = arith.subf %9, %10 : vector<96x128xf32>
    %cst_9 = arith.constant 5.000000e-01 : f32
    %12 = vector.broadcast %cst_9 : f32 to vector<96x128xf32>
    %13 = arith.mulf %11, %12 : vector<96x128xf32>
    %14 = arith.addf %10, %13 : vector<96x128xf32>
    %cst_10 = arith.constant 1.000000e+00 : f32
    %15 = vector.broadcast %cst_10 : f32 to vector<96x128xf32>
    %16 = arith.cmpf oge, %14, %15 : vector<96x128xf32>
    %cst_11 = arith.constant 0.000000e+00 : f32
    %17 = vector.broadcast %cst_11 : f32 to vector<96x128xf32>
    %18 = arith.select %16, %17, %14 : vector<96x128xi1>, vector<96x128xf32>
    %c0_12 = arith.constant 0 : index
    %c0_13 = arith.constant 0 : index
    %19 = vector.load %arg8[%c0_12, %c0_13] : memref<96x128xf32, #tpu.memory_space<vmem>>, vector<96x128xf32>
    tpu.vector_store %arg8[%c0_12, %c0_13], %18 {strides = array<i32>} : memref<96x128xf32, #tpu.memory_space<vmem>>, vector<96x128xf32>,
    %20 = arith.extui %16 : vector<96x128xi1> to vector<96x128xi32>
    %21 = arith.sitofp %20 : vector<96x128xi32> to vector<96x128xf32>
    %22 = arith.truncf %21 : vector<96x128xf32> to vector<96x128xbf16>
    %23 = vector.extract_strided_slice %22 {offsets = [0, 0], sizes = [32, 128], strides = [1, 1]} : vector<96x128xbf16> to vector<32x128xbf16>
    %24 = vector.shape_cast %23 : vector<32x128xbf16> to vector<4x8x128xbf16>
    %25 = vector.extract_strided_slice %22 {offsets = [32, 0], sizes = [32, 128], strides = [1, 1]} : vector<96x128xbf16> to vector<32x128xbf16>
    %26 = vector.shape_cast %25 : vector<32x128xbf16> to vector<4x8x128xbf16>
    %27 = vector.extract_strided_slice %22 {offsets = [64, 0], sizes = [32, 128], strides = [1, 1]} : vector<96x128xbf16> to vector<32x128xbf16>
    %28 = vector.shape_cast %27 : vector<32x128xbf16> to vector<4x8x128xbf16>
    %29 = tpu.iota {dimensions = array<i32: 2>} : vector<1x1x128xi32>
    %c0_i32_14 = arith.constant 0 : i32
    %30 = vector.broadcast %c0_i32_14 : i32 to vector<1x1x128xi32>
    %31 = arith.cmpi sge, %29, %30 : vector<1x1x128xi32>
    %c64_i32 = arith.constant 64 : i32
    %32 = vector.broadcast %c64_i32 : i32 to vector<1x1x128xi32>
    %33 = arith.cmpi slt, %29, %32 : vector<1x1x128xi32>
    %34 = arith.andi %31, %33 : vector<1x1x128xi1>
    %35 = arith.extui %34 : vector<1x1x128xi1> to vector<1x1x128xi32>
    %36 = arith.sitofp %35 : vector<1x1x128xi32> to vector<1x1x128xf32>
    %37 = arith.truncf %36 : vector<1x1x128xf32> to vector<1x1x128xbf16>
    %c64_i32_15 = arith.constant 64 : i32
    %38 = vector.broadcast %c64_i32_15 : i32 to vector<1x1x128xi32>
    %39 = arith.cmpi sge, %29, %38 : vector<1x1x128xi32>
    %c128_i32 = arith.constant 128 : i32
    %40 = vector.broadcast %c128_i32 : i32 to vector<1x1x128xi32>
    %41 = arith.cmpi slt, %29, %40 : vector<1x1x128xi32>
    %42 = arith.andi %39, %41 : vector<1x1x128xi1>
    %43 = arith.extui %42 : vector<1x1x128xi1> to vector<1x1x128xi32>
    %44 = arith.sitofp %43 : vector<1x1x128xi32> to vector<1x1x128xf32>
    %45 = arith.truncf %44 : vector<1x1x128xf32> to vector<1x1x128xbf16>
    %46 = vector.broadcast %37 : vector<1x1x128xbf16> to vector<4x8x128xbf16>
    %47 = arith.mulf %26, %46 : vector<4x8x128xbf16>
    %48 = vector.broadcast %37 : vector<1x1x128xbf16> to vector<4x8x128xbf16>
    %49 = arith.mulf %24, %48 : vector<4x8x128xbf16>
    "tpu.trace_start"() <{level = 10 : i32, message = "hdn,hcn->hdc"}> : () -> ()
    %cst_16 = arith.constant dense<0.000000e+00> : vector<4x8x8xf32>
    %50 = tpu.matmul %28, %47, %cst_16 {dimension_numbers = #tpu.dot_dimension_numbers<[2], [2], [1], [1], [0, 0, 0, 1, 1, 1], [0], [0]>} : vector<4x8x128xbf16>, vector<4x8x128xbf16>, vector<4x8x8xf32> -> vector<4x8x8xf32>
    "tpu.trace_stop"() : () -> ()
    %cst_17 = arith.constant 1.250000e-01 : f32
    %51 = vector.broadcast %cst_17 : f32 to vector<4x8x8xf32>
    %52 = arith.mulf %50, %51 : vector<4x8x8xf32>
    %53 = arith.truncf %52 : vector<4x8x8xf32> to vector<4x8x8xbf16>
    "tpu.trace_start"() <{level = 10 : i32, message = "hdc,hcn->hdn"}> : () -> ()
    %cst_18 = arith.constant dense<0.000000e+00> : vector<4x8x128xf32>
    %54 = tpu.matmul %53, %49, %cst_18 {dimension_numbers = #tpu.dot_dimension_numbers<[2], [1], [1], [2], [0, 0, 0, 1, 1, 2], [0], [0]>} : vector<4x8x8xbf16>, vector<4x8x128xbf16>, vector<4x8x128xf32> -> vector<4x8x128xf32>
    "tpu.trace_stop"() : () -> ()
    %55 = vector.shape_cast %54 : vector<4x8x128xf32> to vector<32x128xf32>
    %56 = vector.broadcast %45 : vector<1x1x128xbf16> to vector<4x8x128xbf16>
    %57 = arith.mulf %26, %56 : vector<4x8x128xbf16>
    %58 = vector.broadcast %45 : vector<1x1x128xbf16> to vector<4x8x128xbf16>
    %59 = arith.mulf %24, %58 : vector<4x8x128xbf16>
    "tpu.trace_start"() <{level = 10 : i32, message = "hdn,hcn->hdc"}> : () -> ()
    %cst_19 = arith.constant dense<0.000000e+00> : vector<4x8x8xf32>
    %60 = tpu.matmul %28, %57, %cst_19 {dimension_numbers = #tpu.dot_dimension_numbers<[2], [2], [1], [1], [0, 0, 0, 1, 1, 1], [0], [0]>} : vector<4x8x128xbf16>, vector<4x8x128xbf16>, vector<4x8x8xf32> -> vector<4x8x8xf32>
    "tpu.trace_stop"() : () -> ()
    %cst_20 = arith.constant 1.250000e-01 : f32
    %61 = vector.broadcast %cst_20 : f32 to vector<4x8x8xf32>
    %62 = arith.mulf %60, %61 : vector<4x8x8xf32>
    %63 = arith.truncf %62 : vector<4x8x8xf32> to vector<4x8x8xbf16>
    "tpu.trace_start"() <{level = 10 : i32, message = "hdc,hcn->hdn"}> : () -> ()
    %cst_21 = arith.constant dense<0.000000e+00> : vector<4x8x128xf32>
    %64 = tpu.matmul %63, %59, %cst_21 {dimension_numbers = #tpu.dot_dimension_numbers<[2], [1], [1], [2], [0, 0, 0, 1, 1, 2], [0], [0]>} : vector<4x8x8xbf16>, vector<4x8x128xbf16>, vector<4x8x128xf32> -> vector<4x8x128xf32>
    "tpu.trace_stop"() : () -> ()
    %65 = vector.shape_cast %64 : vector<4x8x128xf32> to vector<32x128xf32>
    %66 = arith.addf %55, %65 : vector<32x128xf32>
    %c0_22 = arith.constant 0 : index
    %c0_23 = arith.constant 0 : index
    %67 = vector.load %arg9[%c0_22, %c0_23] : memref<32x128xf32, #tpu.memory_space<vmem>>, vector<32x128xf32>
    %68 = arith.subf %66, %67 : vector<32x128xf32>
    %cst_24 = arith.constant 5.000000e-01 : f32
    %69 = vector.broadcast %cst_24 : f32 to vector<32x128xf32>
    %70 = arith.mulf %68, %69 : vector<32x128xf32>
    %71 = arith.addf %67, %70 : vector<32x128xf32>
    %cst_25 = arith.constant 5.000000e-01 : f32
    %72 = vector.broadcast %cst_25 : f32 to vector<32x128xf32>
    %73 = arith.cmpf oge, %71, %72 : vector<32x128xf32>
    %cst_26 = arith.constant 0.000000e+00 : f32
    %74 = vector.broadcast %cst_26 : f32 to vector<32x128xf32>
    %75 = arith.select %73, %74, %71 : vector<32x128xi1>, vector<32x128xf32>
    %c0_27 = arith.constant 0 : index
    %c0_28 = arith.constant 0 : index
    %76 = vector.load %arg9[%c0_27, %c0_28] : memref<32x128xf32, #tpu.memory_space<vmem>>, vector<32x128xf32>
    tpu.vector_store %arg9[%c0_27, %c0_28], %75 {strides = array<i32>} : memref<32x128xf32, #tpu.memory_space<vmem>>, vector<32x128xf32>,
    %77 = arith.extui %73 : vector<32x128xi1> to vector<32x128xi32>
    %78 = arith.sitofp %77 : vector<32x128xi32> to vector<32x128xf32>
    %79 = arith.truncf %78 : vector<32x128xf32> to vector<32x128xbf16>
    %c0_29 = arith.constant 0 : index
    %c0_30 = arith.constant 0 : index
    %80 = vector.load %arg5[%c0_29, %c0_30] : memref<32x32xbf16, #tpu.memory_space<vmem>>, vector<32x32xbf16>
    %cst_31 = arith.constant dense<0.000000e+00> : vector<32x128xf32>
    %81 = tpu.matmul %80, %79, %cst_31 {dimension_numbers = #tpu.dot_dimension_numbers<[1], [0], [0], [1], [0, 0, 1, 1], [], []>} : vector<32x32xbf16>, vector<32x128xbf16>, vector<32x128xf32> -> vector<32x128xf32>
    %c0_32 = arith.constant 0 : index
    %c0_33 = arith.constant 0 : index
    %82 = vector.load %arg6[%c0_32, %c0_33] : memref<32x1xf32, #tpu.memory_space<vmem>>, vector<32x1xf32>
    %83 = vector.broadcast %82 : vector<32x1xf32> to vector<32x128xf32>
    %84 = arith.addf %81, %83 : vector<32x128xf32>
    %c0_34 = arith.constant 0 : index
    %c0_35 = arith.constant 0 : index
    %85 = vector.load %arg10[%c0_34, %c0_35] : memref<32x128xf32, #tpu.memory_space<vmem>>, vector<32x128xf32>
    %86 = arith.subf %84, %85 : vector<32x128xf32>
    %cst_36 = arith.constant 5.000000e-01 : f32
    %87 = vector.broadcast %cst_36 : f32 to vector<32x128xf32>
    %88 = arith.mulf %86, %87 : vector<32x128xf32>
    %89 = arith.addf %85, %88 : vector<32x128xf32>
    %cst_37 = arith.constant 1.000000e+00 : f32
    %90 = vector.broadcast %cst_37 : f32 to vector<32x128xf32>
    %91 = arith.cmpf oge, %89, %90 : vector<32x128xf32>
    %cst_38 = arith.constant 0.000000e+00 : f32
    %92 = vector.broadcast %cst_38 : f32 to vector<32x128xf32>
    %93 = arith.select %91, %92, %89 : vector<32x128xi1>, vector<32x128xf32>
    %c0_39 = arith.constant 0 : index
    %c0_40 = arith.constant 0 : index
    %94 = vector.load %arg10[%c0_39, %c0_40] : memref<32x128xf32, #tpu.memory_space<vmem>>, vector<32x128xf32>
    tpu.vector_store %arg10[%c0_39, %c0_40], %93 {strides = array<i32>} : memref<32x128xf32, #tpu.memory_space<vmem>>, vector<32x128xf32>,
    %95 = arith.extui %91 : vector<32x128xi1> to vector<32x128xi32>
    %96 = arith.sitofp %95 : vector<32x128xi32> to vector<32x128xf32>
    %97 = arith.truncf %96 : vector<32x128xf32> to vector<32x128xbf16>
    %c0_41 = arith.constant 0 : index
    %c0_42 = arith.constant 0 : index
    %c0_43 = arith.constant 0 : index
    %98 = vector.load %arg7[%c0_41, %c0_42, %c0_43] : memref<1x32x128xbf16, #tpu.memory_space<vmem>>, vector<1x32x128xbf16>
    %99 = vector.shape_cast %98 : vector<1x32x128xbf16> to vector<32x128xbf16>
    %100 = vector.shape_cast %97 : vector<32x128xbf16> to vector<1x32x128xbf16>
    tpu.vector_store %arg7[%c0_41, %c0_42, %c0_43], %100 {strides = array<i32>} : memref<1x32x128xbf16, #tpu.memory_space<vmem>>, vector<1x32x128xbf16>,
    return
  }
  func.func @transform_0(%arg0: i32, %arg1: i32) -> (i32, i32, i32) {
    %c0_i32 = arith.constant 0 : i32
    %c0_i32_0 = arith.constant 0 : i32
    return %arg1, %c0_i32, %arg0 : i32, i32, i32
  }
  func.func @transform_1(%arg0: i32, %arg1: i32) -> (i32, i32) {
    %c0_i32 = arith.constant 0 : i32
    %c0_i32_0 = arith.constant 0 : i32
    %c0_i32_1 = arith.constant 0 : i32
    return %c0_i32, %c0_i32_0 : i32, i32
  }
  func.func @transform_2(%arg0: i32, %arg1: i32) -> (i32, i32) {
    %c0_i32 = arith.constant 0 : i32
    %c0_i32_0 = arith.constant 0 : i32
    %c0_i32_1 = arith.constant 0 : i32
    return %c0_i32, %c0_i32_0 : i32, i32
  }
  func.func @transform_3(%arg0: i32, %arg1: i32) -> (i32, i32) {
    %c0_i32 = arith.constant 0 : i32
    %c0_i32_0 = arith.constant 0 : i32
    %c0_i32_1 = arith.constant 0 : i32
    return %c0_i32, %c0_i32_0 : i32, i32
  }
  func.func @transform_4(%arg0: i32, %arg1: i32) -> (i32, i32) {
    %c0_i32 = arith.constant 0 : i32
    %c0_i32_0 = arith.constant 0 : i32
    %c0_i32_1 = arith.constant 0 : i32
    return %c0_i32, %c0_i32_0 : i32, i32
  }
  func.func @transform_5(%arg0: i32, %arg1: i32) -> (i32, i32, i32) {
    %c0_i32 = arith.constant 0 : i32
    %c0_i32_0 = arith.constant 0 : i32
    return %arg1, %c0_i32, %arg0 : i32, i32, i32
  }
}

</mosaic_0001>

<llo_original>
// kernel: tpu_custom_call.1
$region0: #{tpu_custom_call.1}
  #allocation0 [shape = 'u32[]', space=smem, size = 0x4, offset = 0x4, fixed_abs, tag = 'smem constant byte address 0x4 - core index']
  #allocation1 [shape = 'u32[144,128]{1,0:T(1,128)}', space=vmem, size = 0x12000, scoped, tag = 'internal scratch']
  #allocation2 [shape = 'f32[96,128]{1,0:T(8,128)}', space=vmem, size = 0xc000, scoped, tag = 'scratch operand']
  #allocation3 [shape = 'f32[32,128]{1,0:T(8,128)}', space=vmem, size = 0x4000, scoped, tag = 'scratch operand']
  #allocation4 [shape = 'f32[32,128]{1,0:T(8,128)}', space=vmem, size = 0x4000, scoped, tag = 'scratch operand']
  %s0 = inlined_call_operand.vmem [shape: bf16[4,32,128], index: 0, kind: input, shape index: {}]
  %s1 = inlined_call_operand.vmem [shape: bf16[96,32], index: 1, kind: input, shape index: {}]
  %s2 = inlined_call_operand.vmem [shape: f32[96,1], index: 2, kind: input, shape index: {}]
  %s3 = inlined_call_operand.vmem [shape: bf16[32,32], index: 3, kind: input, shape index: {}]
  %s4 = inlined_call_operand.vmem [shape: f32[32,1], index: 4, kind: input, shape index: {}]
  %s5 = inlined_call_operand.hbm [shape: bf16[4,32,128], index: 5, kind: output, shape index: {}]
  %s6 = sld [smem:[#allocation0]]
  $region57: #{tpu_custom_call.1} parent=0
    _
  %s8 = ssub.s32 1, %s6
  %s9 = scalar_select 0, %s8, %s6
  $region1: #{tpu_custom_call.1} parent=0
    #allocation5 [shape = 'u8[16384]{0}', space=vmem, size = 0x4000, scoped, tag = 'output window, operand 0']
    #allocation6 [shape = 's32[2]{0}', space=sflag, size = 0x8, scoped, tag = 'scoped memory for tpu_custom_call.1']
    %10 = vsyncpa [#allocation6], 0
    %s11 = scalar_lea.sflag [#allocation6], 1
    %12 = vsyncpa %s11, 0
    loop: start=0, step=1, limit=6
    $region2: #{tpu_custom_call.1} parent=1 // loop_pre_header
      _
    $region3: #{tpu_custom_call.1} parent=1 // loop_header
      %s14 = sphi 0, %s18
      %p15 = scmp.ge.s32.totalorder %s14, 6
      %s21 = sphi 0, %s33
      %s22 = sphi 0, %s29
      %s23 = sphi 0, %s21
      %s24 = sphi 0, %s22
      %s25 = sphi 0, %s23
      %s26 = sphi 0, %s24
      %s38 = sphi 0, %s40
      %s41 = sphi 0, %s38
      %s42 = sphi 0, %s41
      %s58 = sphi 0, %s42
      %s62 = sphi 0, %s62
      %s64 = sphi 0, %s62
      %s65 = sphi 0, %s64
      %s79 = sphi 0, %s65
      %s83 = sphi 0, %s83
      %s85 = sphi 0, %s83
      %s86 = sphi 0, %s85
      %s100 = sphi 0, %s86
      %s104 = sphi 0, %s104
      %s106 = sphi 0, %s104
      %s107 = sphi 0, %s106
      %s121 = sphi 0, %s107
      %s125 = sphi 0, %s125
      %s127 = sphi 0, %s125
      %s128 = sphi 0, %s127
      %s142 = sphi 0, %s128
      %s150 = sphi 0, %s152
      %s153 = sphi 0, %s150
      %s154 = sphi 0, %s153
      %s170 = sphi 0, %s154
    $region4: #{tpu_custom_call.1} parent=1 // loop_header_branch
      %17 = sbr.rel (%p15) target = $region8
    $region5: #{tpu_custom_call.1} parent=1 // loop_body
      %s19 = ssub.s32 %s14, 1
      %s20 = ssub.s32 %s14, 2
      %s27 = sadd.s32 1, %s22
      %p28 = scmp.ge.s32.totalorder %s27, 4
      %s29 = scalar_select %p28, 0, %s27
      %s30 = sadd.s32 1, %s21
      %s31 = scalar_select %p28, %s30, %s21
      %p32 = scmp.ge.s32.totalorder %s31, 1
      %s33 = scalar_select %p32, 0, %s31
      %s34 = ssub.s32 %s22, %s29
      %s35 = ssub.s32 %s21, %s33
      %s36 = sor.u32 %s34, %s35
      %p37 = scmp.eq.s32.totalorder %s36, 0
      %s39 = sadd.s32 %s38, 1
      %s40 = scalar_select %p37, %s38, %s39
      %p43 = pneg %p37
      %p44 = scmp.eq.s32.totalorder %s14, 3
      %p45 = por %p43, %p44
      %p46 = scmp.ne.s32.totalorder %s38, %s41
      %p47 = scmp.eq.s32.totalorder %s14, 0
      %p48 = por %p46, %p47
      %p49 = scmp.ne.s32.totalorder %s38, %s41
      %p50 = scmp.eq.s32.totalorder %s19, 3
      %p51 = por %p49, %p50
      %p52 = scmp.ne.s32.totalorder %s41, %s42
      %p53 = scmp.eq.s32.totalorder %s19, 0
      %p54 = por %p52, %p53
      %p55 = scmp.ne.s32.totalorder %s41, %s42
      %p56 = scmp.eq.s32.totalorder %s20, 3
      %p57 = por %p55, %p56
      %p59 = scmp.ne.s32.totalorder %s42, %s58
      %p60 = scmp.eq.s32.totalorder %s20, 0
      %p61 = por %p59, %p60
      %s63 = sadd.s32 %s62, 1
      %p66 = scmp.eq.s32.totalorder %s14, 3
      %p67 = scmp.ne.s32.totalorder %s62, %s64
      %p68 = scmp.eq.s32.totalorder %s14, 0
      %p69 = por %p67, %p68
      %p70 = scmp.ne.s32.totalorder %s62, %s64
      %p71 = scmp.eq.s32.totalorder %s19, 3
      %p72 = por %p70, %p71
      %p73 = scmp.ne.s32.totalorder %s64, %s65
      %p74 = scmp.eq.s32.totalorder %s19, 0
      %p75 = por %p73, %p74
      %p76 = scmp.ne.s32.totalorder %s64, %s65
      %p77 = scmp.eq.s32.totalorder %s20, 3
      %p78 = por %p76, %p77
      %p80 = scmp.ne.s32.totalorder %s65, %s79
      %p81 = scmp.eq.s32.totalorder %s20, 0
      %p82 = por %p80, %p81
      %s84 = sadd.s32 %s83, 1
      %p87 = scmp.eq.s32.totalorder %s14, 3
      %p88 = scmp.ne.s32.totalorder %s83, %s85
      %p89 = scmp.eq.s32.totalorder %s14, 0
      %p90 = por %p88, %p89
      %p91 = scmp.ne.s32.totalorder %s83, %s85
      %p92 = scmp.eq.s32.totalorder %s19, 3
      %p93 = por %p91, %p92
      %p94 = scmp.ne.s32.totalorder %s85, %s86
      %p95 = scmp.eq.s32.totalorder %s19, 0
      %p96 = por %p94, %p95
      %p97 = scmp.ne.s32.totalorder %s85, %s86
      %p98 = scmp.eq.s32.totalorder %s20, 3
      %p99 = por %p97, %p98
      %p101 = scmp.ne.s32.totalorder %s86, %s100
      %p102 = scmp.eq.s32.totalorder %s20, 0
      %p103 = por %p101, %p102
      %s105 = sadd.s32 %s104, 1
      %p108 = scmp.eq.s32.totalorder %s14, 3
      %p109 = scmp.ne.s32.totalorder %s104, %s106
      %p110 = scmp.eq.s32.totalorder %s14, 0
      %p111 = por %p109, %p110
      %p112 = scmp.ne.s32.totalorder %s104, %s106
      %p113 = scmp.eq.s32.totalorder %s19, 3
      %p114 = por %p112, %p113
      %p115 = scmp.ne.s32.totalorder %s106, %s107
      %p116 = scmp.eq.s32.totalorder %s19, 0
      %p117 = por %p115, %p116
      %p118 = scmp.ne.s32.totalorder %s106, %s107
      %p119 = scmp.eq.s32.totalorder %s20, 3
      %p120 = por %p118, %p119
      %p122 = scmp.ne.s32.totalorder %s107, %s121
      %p123 = scmp.eq.s32.totalorder %s20, 0
      %p124 = por %p122, %p123
      %s126 = sadd.s32 %s125, 1
      %p129 = scmp.eq.s32.totalorder %s14, 3
      %p130 = scmp.ne.s32.totalorder %s125, %s127
      %p131 = scmp.eq.s32.totalorder %s14, 0
      %p132 = por %p130, %p131
      %p133 = scmp.ne.s32.totalorder %s125, %s127
      %p134 = scmp.eq.s32.totalorder %s19, 3
      %p135 = por %p133, %p134
      %p136 = scmp.ne.s32.totalorder %s127, %s128
      %p137 = scmp.eq.s32.totalorder %s19, 0
      %p138 = por %p136, %p137
      %p139 = scmp.ne.s32.totalorder %s127, %s128
      %p140 = scmp.eq.s32.totalorder %s20, 3
      %p141 = por %p139, %p140
      %p143 = scmp.ne.s32.totalorder %s128, %s142
      %p144 = scmp.eq.s32.totalorder %s20, 0
      %p145 = por %p143, %p144
      %s146 = ssub.s32 %s22, %s29
      %s147 = ssub.s32 %s21, %s33
      %s148 = sor.u32 %s146, %s147
      %p149 = scmp.eq.s32.totalorder %s148, 0
      %s151 = sadd.s32 %s150, 1
      %s152 = scalar_select %p149, %s150, %s151
      %p155 = pneg %p149
      %p156 = scmp.eq.s32.totalorder %s14, 3
      %p157 = por %p155, %p156
      %p158 = scmp.ne.s32.totalorder %s150, %s153
      %p159 = scmp.eq.s32.totalorder %s14, 0
      %p160 = por %p158, %p159
      %p161 = scmp.ne.s32.totalorder %s150, %s153
      %p162 = scmp.eq.s32.totalorder %s19, 3
      %p163 = por %p161, %p162
      %p164 = scmp.ne.s32.totalorder %s153, %s154
      %p165 = scmp.eq.s32.totalorder %s19, 0
      %p166 = por %p164, %p165
      %p167 = scmp.ne.s32.totalorder %s153, %s154
      %p168 = scmp.eq.s32.totalorder %s20, 3
      %p169 = por %p167, %p168
      %p171 = scmp.ne.s32.totalorder %s154, %s170
      %p172 = scmp.eq.s32.totalorder %s20, 0
      %p173 = por %p171, %p172
      %p174 = scmp.le.s32.totalorder 1, %s14
      %p175 = scmp.lt.s32.totalorder %s14, 5
      %p176 = pnand %p174, %p175
      %p177 = pneg %p176
      // Predicated region
      $region9: #{tpu_custom_call.1} parent=5 // pred_check
        _
      $region10: #{tpu_custom_call.1} parent=5 // pred_check_branch
        %179 = sbr.rel (%p176) target = $region12
      $region11: #{tpu_custom_call.1} parent=5 // pred_region
        %s180 = ssub.s32 %s14, 1
        // Predicated region
        $region13: #{tpu_custom_call.1} parent=11 // pred_check
          %p181 = pneg %p75
        $region14: #{tpu_custom_call.1} parent=11 // pred_check_branch
          %183 = sbr.rel (%p181) target = $region16
        $region15: #{tpu_custom_call.1} parent=11 // pred_region
          _
        $region16: #{tpu_custom_call.1} parent=11 // pred_fallthru
          _
        // Predicated region
        $region17: #{tpu_custom_call.1} parent=11 // pred_check
          %p184 = pneg %p96
        $region18: #{tpu_custom_call.1} parent=11 // pred_check_branch
          %186 = sbr.rel (%p184) target = $region20
        $region19: #{tpu_custom_call.1} parent=11 // pred_region
          _
        $region20: #{tpu_custom_call.1} parent=11 // pred_fallthru
          _
        // Predicated region
        $region21: #{tpu_custom_call.1} parent=11 // pred_check
          %p187 = pneg %p117
        $region22: #{tpu_custom_call.1} parent=11 // pred_check_branch
          %189 = sbr.rel (%p187) target = $region24
        $region23: #{tpu_custom_call.1} parent=11 // pred_region
          _
        $region24: #{tpu_custom_call.1} parent=11 // pred_fallthru
          _
        // Predicated region
        $region25: #{tpu_custom_call.1} parent=11 // pred_check
          %p190 = pneg %p138
        $region26: #{tpu_custom_call.1} parent=11 // pred_check_branch
          %192 = sbr.rel (%p190) target = $region28
        $region27: #{tpu_custom_call.1} parent=11 // pred_region
          _
        $region28: #{tpu_custom_call.1} parent=11 // pred_fallthru
          _
      $region12: #{tpu_custom_call.1} parent=5 // pred_fallthru
        _
      %p193 = scmp.lt.s32.totalorder %s14, 4
      // Predicated region
      $region29: #{tpu_custom_call.1} parent=5 // pred_check
        %p194 = pneg %p193
      $region30: #{tpu_custom_call.1} parent=5 // pred_check_branch
        %196 = sbr.rel (%p194) target = $region32
      $region31: #{tpu_custom_call.1} parent=5 // pred_region
        // Predicated region
        $region33: #{tpu_custom_call.1} parent=31 // pred_check
          %p197 = pneg %p48
        $region34: #{tpu_custom_call.1} parent=31 // pred_check_branch
          %199 = sbr.rel (%p197) target = $region36
        $region35: #{tpu_custom_call.1} parent=31 // pred_region
          %p200 = scmp.lt.s32.totalorder %s22, 3
          %s201 = scalar_select %p200, %s22, 3
          %p202 = scmp.lt.s32.totalorder %s21, 0
          %s203 = scalar_select %p202, %s21, 0
          %s204 = smul.addr %s201, 4
          %s205 = sadd.s32 %s203, %s204
          %s206 = smul.addr %s205, 4
          %s207 = scalar_lea.vmem %s0, %s206
        $region36: #{tpu_custom_call.1} parent=31 // pred_fallthru
          _
      $region32: #{tpu_custom_call.1} parent=5 // pred_fallthru
        _
      %p208 = scmp.le.s32.totalorder 1, %s14
      %p209 = scmp.lt.s32.totalorder %s14, 5
      %p210 = pnand %p208, %p209
      %p211 = pneg %p210
      // Predicated region
      $region37: #{tpu_custom_call.1} parent=5 // pred_check
        _
      $region38: #{tpu_custom_call.1} parent=5 // pred_check_branch
        %213 = sbr.rel (%p210) target = $region40
      $region39: #{tpu_custom_call.1} parent=5 // pred_region
        %s214 = ssub.s32 %s14, 1
        %p215 = scmp.lt.s32.totalorder %s24, 3
        %s216 = scalar_select %p215, %s24, 3
        %p217 = scmp.lt.s32.totalorder %s23, 0
        %s218 = scalar_select %p217, %s23, 0
        %s219 = smul.addr %s216, 4
        %s220 = sadd.s32 %s218, %s219
        %s221 = smul.addr %s220, 4
        %s222 = scalar_lea.vmem %s0, %s221
        %p223 = pneg %p54
        %p224 = pneg %p51
        %p225 = pneg %p75
        %p226 = pneg %p72
        %p227 = pneg %p96
        %p228 = pneg %p93
        %p229 = pneg %p117
        %p230 = pneg %p114
        %p231 = pneg %p138
        %p232 = pneg %p135
        %p233 = pneg %p166
        %p234 = pneg %p163
        %s235 = sand.u32 %s153, 1
        %s236 = scalar_lea.sflag [#allocation6], %s235
        %s237 = sand.u32 %s153, 1
        %s238 = smul.addr %s237, 16
        %s239 = scalar_lea.vmem [#allocation5], %s238
        %p240 = scmp.lt.s32.totalorder %s24, 3
        %s241 = scalar_select %p240, %s24, 3
        %p242 = scmp.lt.s32.totalorder %s23, 0
        %s243 = scalar_select %p242, %s23, 0
        %s244 = smul.addr %s241, 4
        %s245 = sadd.s32 %s243, %s244
        %s246 = smul.addr %s245, 4
        %s247 = scalar_lea.vmem %s0, %s246
        %p249 = scmp.eq.s32.totalorder %s24, 0
        // Predicated region
        $region41: #{tpu_custom_call.1} parent=39 // pred_check
          %p250 = pneg %p249
        $region42: #{tpu_custom_call.1} parent=39 // pred_check_branch
          %252 = sbr.rel (%p250) target = $region44
        $region43: #{tpu_custom_call.1} parent=39 // pred_region
          %253 = vst [vmem:[#allocation2] sm:$0xff] 0.0
          %254 = vst [vmem:[#allocation2 + $0x8] sm:$0xff] 0.0
          %255 = vst [vmem:[#allocation2 + $0x10] sm:$0xff] 0.0
          %256 = vst [vmem:[#allocation2 + $0x18] sm:$0xff] 0.0
          %257 = vst [vmem:[#allocation2 + $0x20] sm:$0xff] 0.0
          %258 = vst [vmem:[#allocation2 + $0x28] sm:$0xff] 0.0
          %259 = vst [vmem:[#allocation2 + $0x30] sm:$0xff] 0.0
          %260 = vst [vmem:[#allocation2 + $0x38] sm:$0xff] 0.0
          %261 = vst [vmem:[#allocation2 + $0x40] sm:$0xff] 0.0
          %262 = vst [vmem:[#allocation2 + $0x48] sm:$0xff] 0.0
          %263 = vst [vmem:[#allocation2 + $0x50] sm:$0xff] 0.0
          %264 = vst [vmem:[#allocation2 + $0x58] sm:$0xff] 0.0
          %265 = vst [vmem:[#allocation3] sm:$0xff] 0.0
          %266 = vst [vmem:[#allocation3 + $0x8] sm:$0xff] 0.0
          %267 = vst [vmem:[#allocation3 + $0x10] sm:$0xff] 0.0
          %268 = vst [vmem:[#allocation3 + $0x18] sm:$0xff] 0.0
          %269 = vst [vmem:[#allocation4] sm:$0xff] 0.0
          %270 = vst [vmem:[#allocation4 + $0x8] sm:$0xff] 0.0
          %271 = vst [vmem:[#allocation4 + $0x10] sm:$0xff] 0.0
          %272 = vst [vmem:[#allocation4 + $0x18] sm:$0xff] 0.0
        $region44: #{tpu_custom_call.1} parent=39 // pred_fallthru
          _
        %v273 = vld [vmem:[%s247] sm:$0xf]
        %v274 = vld [vmem:[%s247 + $0x4] sm:$0xf]
        %v275 = vld [vmem:[%s247 + $0x8] sm:$0xf]
        %v276 = vld [vmem:[%s247 + $0xc] sm:$0xf]
        %v277 = vld [vmem:[%s1] sm:$0xf]
        %v278 = vld [vmem:[%s1 + $0x4] sm:$0xf]
        %v279 = vld [vmem:[%s1 + $0x8] sm:$0xf]
        %v280 = vld [vmem:[%s1 + $0xc] sm:$0xf]
        %v281 = vld [vmem:[%s1 + $0x10] sm:$0xf]
        %v282 = vld [vmem:[%s1 + $0x14] sm:$0xf]
        %v283 = vld [vmem:[%s1 + $0x18] sm:$0xf]
        %v284 = vld [vmem:[%s1 + $0x1c] sm:$0xf]
        %v285 = vld [vmem:[%s1 + $0x20] sm:$0xf]
        %v286 = vld [vmem:[%s1 + $0x24] sm:$0xf]
        %v287 = vld [vmem:[%s1 + $0x28] sm:$0xf]
        %v288 = vld [vmem:[%s1 + $0x2c] sm:$0xf]
        %v289 = vld [vmem:[%s2] sm:$0xff]
        %v290 = vld [vmem:[%s2 + $0x8] sm:$0xff]
        %v291 = vld [vmem:[%s2 + $0x10] sm:$0xff]
        %v292 = vld [vmem:[%s2 + $0x18] sm:$0xff]
        %v293 = vld [vmem:[%s2 + $0x20] sm:$0xff]
        %v294 = vld [vmem:[%s2 + $0x28] sm:$0xff]
        %v295 = vld [vmem:[%s2 + $0x30] sm:$0xff]
        %v296 = vld [vmem:[%s2 + $0x38] sm:$0xff]
        %v297 = vld [vmem:[%s2 + $0x40] sm:$0xff]
        %v298 = vld [vmem:[%s2 + $0x48] sm:$0xff]
        %v299 = vld [vmem:[%s2 + $0x50] sm:$0xff]
        %v300 = vld [vmem:[%s2 + $0x58] sm:$0xff]
        %302 = vset.pattern.permute.xlu0 0
        %303 = vperm.xlu0 %302, %v289
        %v304 = vpop.permute.xlu0 %303
        %307 = vset.pattern.permute.xlu0 0
        %308 = vperm.xlu0 %307, %v290
        %v309 = vpop.permute.xlu0 %308
        %312 = vset.pattern.permute.xlu0 0
        %313 = vperm.xlu0 %312, %v291
        %v314 = vpop.permute.xlu0 %313
        %317 = vset.pattern.permute.xlu0 0
        %318 = vperm.xlu0 %317, %v292
        %v319 = vpop.permute.xlu0 %318
        %322 = vset.pattern.permute.xlu0 0
        %323 = vperm.xlu0 %322, %v293
        %v324 = vpop.permute.xlu0 %323
        %327 = vset.pattern.permute.xlu0 0
        %328 = vperm.xlu0 %327, %v294
        %v329 = vpop.permute.xlu0 %328
        %332 = vset.pattern.permute.xlu0 0
        %333 = vperm.xlu0 %332, %v295
        %v334 = vpop.permute.xlu0 %333
        %337 = vset.pattern.permute.xlu0 0
        %338 = vperm.xlu0 %337, %v296
        %v339 = vpop.permute.xlu0 %338
        %342 = vset.pattern.permute.xlu0 0
        %343 = vperm.xlu0 %342, %v297
        %v344 = vpop.permute.xlu0 %343
        %347 = vset.pattern.permute.xlu0 0
        %348 = vperm.xlu0 %347, %v298
        %v349 = vpop.permute.xlu0 %348
        %352 = vset.pattern.permute.xlu0 0
        %353 = vperm.xlu0 %352, %v299
        %v354 = vpop.permute.xlu0 %353
        %357 = vset.pattern.permute.xlu0 0
        %358 = vperm.xlu0 %357, %v300
        %v359 = vpop.permute.xlu0 %358
        %v373 = vunpack.c.l.b16 %v277
        %v374 = vunpack.c.l.b16 %v278
        %v375 = vunpack.c.l.b16 %v279
        %v376 = vunpack.c.l.b16 %v280
        %v377 = vunpack.c.l.b16 %v281
        %v378 = vunpack.c.l.b16 %v282
        %v379 = vunpack.c.l.b16 %v283
        %v380 = vunpack.c.l.b16 %v284
        %v381 = vunpack.c.l.b16 %v285
        %v382 = vunpack.c.l.b16 %v286
        %v383 = vunpack.c.l.b16 %v287
        %v384 = vunpack.c.l.b16 %v288
        %v385 = vpack.c.b16 %v374, %v373
        %v386 = vpack.c.b16 %v376, %v375
        %v387 = vpack.c.b16 %v378, %v377
        %v388 = vpack.c.b16 %v380, %v379
        %v389 = vpack.c.b16 %v382, %v381
        %v390 = vpack.c.b16 %v384, %v383
        %v395 = vunpack.c.l.b16 %v273
        %v396 = vunpack.c.l.b16 %v274
        %v397 = vunpack.c.l.b16 %v275
        %v398 = vunpack.c.l.b16 %v276
        %v399 = vpack.c.b16 %v396, %v395
        %v400 = vpack.c.b16 %v398, %v397
        %vm403 = vcmask 261120
        %v405 = vsel %vm403, %v385, 0
        %v408 = vsel %vm403, %v386, 0
        %v411 = vsel %vm403, %v387, 0
        %v414 = vsel %vm403, %v388, 0
        %v417 = vsel %vm403, %v389, 0
        %v420 = vsel %vm403, %v390, 0
        %422 = vmatprep.subr.bf16.mxu0 0
        %423 = vmatpush1.bf16.msra.mxu0 %v399
        %424 = vmatprep.subr.bf16.mxu0 0
        %425 = vmatpush1.bf16.msra.mxu0 %v400
        %426 = vmatprep.subr.bf16.mxu0 0
        %427 = vmatpush1.bf16.msra.mxu0 0
        %428 = vmatprep.subr.bf16.mxu0 0
        %429 = vmatpush1.bf16.msra.mxu0 0
        %430 = vmatprep.subr.bf16.mxu0 0
        %431 = vmatpush1.bf16.msra.mxu0 0
        %432 = vmatprep.subr.bf16.mxu0 0
        %433 = vmatpush1.bf16.msra.mxu0 0
        %434 = vmatprep.subr.bf16.mxu0 0
        %435 = vmatpush1.bf16.msra.mxu0 0
        %436 = vmatprep.subr.bf16.mxu0 0
        %437 = vmatpush1.bf16.msra.mxu0 0
        %438 = vmatprep.subr.bf16.mxu0 0
        %439 = vmatpush1.bf16.msra.mxu0 0
        %440 = vmatprep.subr.bf16.mxu0 0
        %441 = vmatpush1.bf16.msra.mxu0 0
        %442 = vmatprep.subr.bf16.mxu0 0
        %443 = vmatpush1.bf16.msra.mxu0 0
        %444 = vmatprep.subr.bf16.mxu0 0
        %445 = vmatpush1.bf16.msra.mxu0 0
        %446 = vmatprep.subr.bf16.mxu0 0
        %447 = vmatpush1.bf16.msra.mxu0 0
        %448 = vmatprep.subr.bf16.mxu0 0
        %449 = vmatpush1.bf16.msra.mxu0 0
        %450 = vmatprep.subr.bf16.mxu0 0
        %451 = vmatpush1.bf16.msra.mxu0 0
        %452 = vmatprep.subr.bf16.mxu0 0
        %453 = vmatpush1.bf16.msra.mxu0 0
        %454 = vmatprep.mubr.bf16.mxu0 0
        %455 = vmatmul.mubr.bf16.gmra.mrb[0].mxu0 %v405
        %v456 = vpop.f32.mrb[0].mxu0
        %v457 = vadd.f32 %v304, %v456
        %v458 = vpop.f32.mrb[0].mxu0
        %v459 = vpop.f32.mrb[0].mxu0
        %v460 = vadd.f32 %v309, %v459
        %v461 = vpop.f32.mrb[0].mxu0
        %462 = vmatprep.mubr.bf16.mxu0 0
        %463 = vmatmul.mubr.bf16.gmra.mrb[0].mxu0 %v408
        %v464 = vpop.f32.mrb[0].mxu0
        %v465 = vadd.f32 %v314, %v464
        %v466 = vpop.f32.mrb[0].mxu0
        %v467 = vpop.f32.mrb[0].mxu0
        %v468 = vadd.f32 %v319, %v467
        %v469 = vpop.f32.mrb[0].mxu0
        %470 = vmatprep.mubr.bf16.mxu0 0
        %471 = vmatmul.mubr.bf16.gmra.mrb[0].mxu0 %v411
        %v472 = vpop.f32.mrb[0].mxu0
        %v473 = vadd.f32 %v324, %v472
        %v474 = vpop.f32.mrb[0].mxu0
        %v475 = vpop.f32.mrb[0].mxu0
        %v476 = vadd.f32 %v329, %v475
        %v477 = vpop.f32.mrb[0].mxu0
        %478 = vmatprep.mubr.bf16.mxu0 0
        %479 = vmatmul.mubr.bf16.gmra.mrb[0].mxu0 %v414
        %v480 = vpop.f32.mrb[0].mxu0
        %v481 = vadd.f32 %v334, %v480
        %v482 = vpop.f32.mrb[0].mxu0
        %v483 = vpop.f32.mrb[0].mxu0
        %v484 = vadd.f32 %v339, %v483
        %v485 = vpop.f32.mrb[0].mxu0
        %486 = vmatprep.mubr.bf16.mxu0 0
        %487 = vmatmul.mubr.bf16.gmra.mrb[0].mxu0 %v417
        %v488 = vpop.f32.mrb[0].mxu0
        %v489 = vadd.f32 %v344, %v488
        %v490 = vpop.f32.mrb[0].mxu0
        %v491 = vpop.f32.mrb[0].mxu0
        %v492 = vadd.f32 %v349, %v491
        %v493 = vpop.f32.mrb[0].mxu0
        %494 = vmatprep.mubr.bf16.mxu0 0
        %495 = vmatmul.mubr.bf16.gmra.mrb[0].mxu0 %v420
        %v496 = vpop.f32.mrb[0].mxu0
        %v497 = vadd.f32 %v354, %v496
        %v498 = vpop.f32.mrb[0].mxu0
        %v499 = vpop.f32.mrb[0].mxu0
        %v500 = vadd.f32 %v359, %v499
        %v501 = vpop.f32.mrb[0].mxu0
        %502 = vdwg.mxu0
        %v503 = vld [vmem:[#allocation2] sm:$0xff]
        %v504 = vld [vmem:[#allocation2 + $0x8] sm:$0xff]
        %v505 = vld [vmem:[#allocation2 + $0x10] sm:$0xff]
        %v506 = vld [vmem:[#allocation2 + $0x18] sm:$0xff]
        %v507 = vld [vmem:[#allocation2 + $0x20] sm:$0xff]
        %v508 = vld [vmem:[#allocation2 + $0x28] sm:$0xff]
        %v509 = vld [vmem:[#allocation2 + $0x30] sm:$0xff]
        %v510 = vld [vmem:[#allocation2 + $0x38] sm:$0xff]
        %v511 = vld [vmem:[#allocation2 + $0x40] sm:$0xff]
        %v512 = vld [vmem:[#allocation2 + $0x48] sm:$0xff]
        %v513 = vld [vmem:[#allocation2 + $0x50] sm:$0xff]
        %v514 = vld [vmem:[#allocation2 + $0x58] sm:$0xff]
        %v515 = vsub.f32 %v457, %v503
        %v516 = vsub.f32 %v460, %v504
        %v517 = vsub.f32 %v465, %v505
        %v518 = vsub.f32 %v468, %v506
        %v519 = vsub.f32 %v473, %v507
        %v520 = vsub.f32 %v476, %v508
        %v521 = vsub.f32 %v481, %v509
        %v522 = vsub.f32 %v484, %v510
        %v523 = vsub.f32 %v489, %v511
        %v524 = vsub.f32 %v492, %v512
        %v525 = vsub.f32 %v497, %v513
        %v526 = vsub.f32 %v500, %v514
        %v527 = vmul.f32 %v515, 0.5
        %v528 = vmul.f32 %v516, 0.5
        %v529 = vmul.f32 %v517, 0.5
        %v530 = vmul.f32 %v518, 0.5
        %v531 = vmul.f32 %v519, 0.5
        %v532 = vmul.f32 %v520, 0.5
        %v533 = vmul.f32 %v521, 0.5
        %v534 = vmul.f32 %v522, 0.5
        %v535 = vmul.f32 %v523, 0.5
        %v536 = vmul.f32 %v524, 0.5
        %v537 = vmul.f32 %v525, 0.5
        %v538 = vmul.f32 %v526, 0.5
        %v539 = vadd.f32 %v503, %v527
        %v540 = vadd.f32 %v504, %v528
        %v541 = vadd.f32 %v505, %v529
        %v542 = vadd.f32 %v506, %v530
        %v543 = vadd.f32 %v507, %v531
        %v544 = vadd.f32 %v508, %v532
        %v545 = vadd.f32 %v509, %v533
        %v546 = vadd.f32 %v510, %v534
        %v547 = vadd.f32 %v511, %v535
        %v548 = vadd.f32 %v512, %v536
        %v549 = vadd.f32 %v513, %v537
        %v550 = vadd.f32 %v514, %v538
        %vm551 = vcmp.ge.f32.partialorder %v539, 1.0
        %vm552 = vcmp.ge.f32.partialorder %v540, 1.0
        %vm553 = vcmp.ge.f32.partialorder %v541, 1.0
        %vm554 = vcmp.ge.f32.partialorder %v542, 1.0
        %vm555 = vcmp.ge.f32.partialorder %v543, 1.0
        %vm556 = vcmp.ge.f32.partialorder %v544, 1.0
        %vm557 = vcmp.ge.f32.partialorder %v545, 1.0
        %vm558 = vcmp.ge.f32.partialorder %v546, 1.0
        %vm559 = vcmp.ge.f32.partialorder %v547, 1.0
        %vm560 = vcmp.ge.f32.partialorder %v548, 1.0
        %vm561 = vcmp.ge.f32.partialorder %v549, 1.0
        %vm562 = vcmp.ge.f32.partialorder %v550, 1.0
        %v563 = vsel %vm551, 0.0, %v539
        %v564 = vsel %vm552, 0.0, %v540
        %v565 = vsel %vm553, 0.0, %v541
        %v566 = vsel %vm554, 0.0, %v542
        %v567 = vsel %vm555, 0.0, %v543
        %v568 = vsel %vm556, 0.0, %v544
        %v569 = vsel %vm557, 0.0, %v545
        %v570 = vsel %vm558, 0.0, %v546
        %v571 = vsel %vm559, 0.0, %v547
        %v572 = vsel %vm560, 0.0, %v548
        %v573 = vsel %vm561, 0.0, %v549
        %v574 = vsel %vm562, 0.0, %v550
        %575 = vst [vmem:[#allocation2] sm:$0xff] %v563
        %576 = vst [vmem:[#allocation2 + $0x8] sm:$0xff] %v564
        %577 = vst [vmem:[#allocation2 + $0x10] sm:$0xff] %v565
        %578 = vst [vmem:[#allocation2 + $0x18] sm:$0xff] %v566
        %579 = vst [vmem:[#allocation2 + $0x20] sm:$0xff] %v567
        %580 = vst [vmem:[#allocation2 + $0x28] sm:$0xff] %v568
        %581 = vst [vmem:[#allocation2 + $0x30] sm:$0xff] %v569
        %582 = vst [vmem:[#allocation2 + $0x38] sm:$0xff] %v570
        %583 = vst [vmem:[#allocation2 + $0x40] sm:$0xff] %v571
        %584 = vst [vmem:[#allocation2 + $0x48] sm:$0xff] %v572
        %585 = vst [vmem:[#allocation2 + $0x50] sm:$0xff] %v573
        %586 = vst [vmem:[#allocation2 + $0x58] sm:$0xff] %v574
        %v587 = vsel %vm551, 1, 0
        %v588 = vsel %vm552, 1, 0
        %v589 = vsel %vm553, 1, 0
        %v590 = vsel %vm554, 1, 0
        %v591 = vsel %vm555, 1, 0
        %v592 = vsel %vm556, 1, 0
        %v593 = vsel %vm557, 1, 0
        %v594 = vsel %vm558, 1, 0
        %v595 = vsel %vm559, 1, 0
        %v596 = vsel %vm560, 1, 0
        %v597 = vsel %vm561, 1, 0
        %v598 = vsel %vm562, 1, 0
        %v599 = vcvt.s32.f32 %v587
        %v600 = vcvt.s32.f32 %v588
        %v601 = vcvt.s32.f32 %v589
        %v602 = vcvt.s32.f32 %v590
        %v603 = vcvt.s32.f32 %v591
        %v604 = vcvt.s32.f32 %v592
        %v605 = vcvt.s32.f32 %v593
        %v606 = vcvt.s32.f32 %v594
        %v607 = vcvt.s32.f32 %v595
        %v608 = vcvt.s32.f32 %v596
        %v609 = vcvt.s32.f32 %v597
        %v610 = vcvt.s32.f32 %v598
        %v611 = vpack.c.bf16 %v600, %v599
        %v612 = vpack.c.bf16 %v602, %v601
        %v613 = vpack.c.bf16 %v604, %v603
        %v614 = vpack.c.bf16 %v606, %v605
        %v615 = vpack.c.bf16 %v608, %v607
        %v616 = vpack.c.bf16 %v610, %v609
        %v619 = vunpack.c.l.b16 %v611
        %v620 = vunpack.c.h.b16 %v611
        %v621 = vunpack.c.l.b16 %v612
        %v622 = vunpack.c.h.b16 %v612
        %v623 = vpack.c.b16 %v619, %v619
        %v624 = vpack.c.b16 %v620, %v620
        %v625 = vpack.c.b16 %v621, %v621
        %v626 = vpack.c.b16 %v622, %v622
        %v633 = vunpack.c.l.b16 %v613
        %v634 = vunpack.c.h.b16 %v613
        %v635 = vunpack.c.l.b16 %v614
        %v636 = vunpack.c.h.b16 %v614
        %v637 = vpack.c.b16 %v633, %v633
        %v638 = vpack.c.b16 %v634, %v634
        %v639 = vpack.c.b16 %v635, %v635
        %v640 = vpack.c.b16 %v636, %v636
        %v647 = vunpack.c.l.b16 %v615
        %v648 = vunpack.c.h.b16 %v615
        %v649 = vunpack.c.l.b16 %v616
        %v650 = vunpack.c.h.b16 %v616
        %v651 = vpack.c.b16 %v647, %v647
        %v652 = vpack.c.b16 %v648, %v648
        %v653 = vpack.c.b16 %v649, %v649
        %v654 = vpack.c.b16 %v650, %v650
        %v659 = vlaneseq
        %v660 = vand.u32 %v659, 127
        %vm661 = vcmp.ge.s32.totalorder %v660, 0
        %vm662 = vcmp.lt.s32.totalorder %v660, 64
        %vm663 = vmand %vm661, %vm662
        %v664 = vsel %vm663, 1, 0
        %v665 = vcvt.s32.f32 %v664
        %v666 = vpack.c.bf16 %v665, %v665
        %vm667 = vcmp.ge.s32.totalorder %v660, 64
        %vm668 = vcmp.lt.s32.totalorder %v660, 128
        %vm669 = vmand %vm667, %vm668
        %v670 = vsel %vm669, 1, 0
        %v671 = vcvt.s32.f32 %v670
        %v672 = vpack.c.bf16 %v671, %v671
        %v673 = vmul.bf16 %v637, %v666
        %v674 = vmul.bf16 %v638, %v666
        %v675 = vmul.bf16 %v639, %v666
        %v676 = vmul.bf16 %v640, %v666
        %v677 = vmul.bf16 %v623, %v666
        %v678 = vmul.bf16 %v624, %v666
        %v679 = vmul.bf16 %v625, %v666
        %v680 = vmul.bf16 %v626, %v666
        %681 = vmatprep.subr.bf16.mxu0 0
        %682 = vmatpush1.bf16.xpose.msra.mxu0 %v673
        %683 = vmatprep.subr.bf16.mxu0 0
        %684 = vmatpush1.bf16.xpose.msra.mxu0 0
        %685 = vmatprep.subr.bf16.mxu0 0
        %686 = vmatpush1.bf16.xpose.msra.mxu0 0
        %687 = vmatprep.subr.bf16.mxu0 0
        %688 = vmatpush1.bf16.xpose.msra.mxu0 0
        %689 = vmatprep.subr.bf16.mxu0 0
        %690 = vmatpush1.bf16.xpose.msra.mxu0 0
        %691 = vmatprep.subr.bf16.mxu0 0
        %692 = vmatpush1.bf16.xpose.msra.mxu0 0
        %693 = vmatprep.subr.bf16.mxu0 0
        %694 = vmatpush1.bf16.xpose.msra.mxu0 0
        %695 = vmatprep.subr.bf16.mxu0 0
        %696 = vmatpush1.bf16.xpose.msra.mxu0 0
        %697 = vmatprep.subr.bf16.mxu0 0
        %698 = vmatpush1.bf16.xpose.msra.mxu0 0
        %699 = vmatprep.subr.bf16.mxu0 0
        %700 = vmatpush1.bf16.xpose.msra.mxu0 0
        %701 = vmatprep.subr.bf16.mxu0 0
        %702 = vmatpush1.bf16.xpose.msra.mxu0 0
        %703 = vmatprep.subr.bf16.mxu0 0
        %704 = vmatpush1.bf16.xpose.msra.mxu0 0
        %705 = vmatprep.subr.bf16.mxu0 0
        %706 = vmatpush1.bf16.xpose.msra.mxu0 0
        %707 = vmatprep.subr.bf16.mxu0 0
        %708 = vmatpush1.bf16.xpose.msra.mxu0 0
        %709 = vmatprep.subr.bf16.mxu0 0
        %710 = vmatpush1.bf16.xpose.msra.mxu0 0
        %711 = vmatprep.subr.bf16.mxu0 0
        %712 = vmatpush1.bf16.xpose.msra.mxu0 0
        %713 = vmatprep.mubr.bf16.mxu0 0
        %714 = vmatmul.mubr.bf16.gmra.mrb[0].mxu0 %v651
        %v715 = vpop.f32.mrb[0].mxu0
        %v716 = vadd.f32 0.0, %v715
        %v717 = vpop.f32.mrb[0].mxu0
        %v718 = vpop.f32.mrb[0].mxu0
        %v719 = vpop.f32.mrb[0].mxu0
        %720 = vdwg.mxu0
        %721 = vmatprep.subr.bf16.mxu0 0
        %722 = vmatpush1.bf16.xpose.msra.mxu0 %v674
        %723 = vmatprep.subr.bf16.mxu0 0
        %724 = vmatpush1.bf16.xpose.msra.mxu0 0
        %725 = vmatprep.subr.bf16.mxu0 0
        %726 = vmatpush1.bf16.xpose.msra.mxu0 0
        %727 = vmatprep.subr.bf16.mxu0 0
        %728 = vmatpush1.bf16.xpose.msra.mxu0 0
        %729 = vmatprep.subr.bf16.mxu0 0
        %730 = vmatpush1.bf16.xpose.msra.mxu0 0
        %731 = vmatprep.subr.bf16.mxu0 0
        %732 = vmatpush1.bf16.xpose.msra.mxu0 0
        %733 = vmatprep.subr.bf16.mxu0 0
        %734 = vmatpush1.bf16.xpose.msra.mxu0 0
        %735 = vmatprep.subr.bf16.mxu0 0
        %736 = vmatpush1.bf16.xpose.msra.mxu0 0
        %737 = vmatprep.subr.bf16.mxu0 0
        %738 = vmatpush1.bf16.xpose.msra.mxu0 0
        %739 = vmatprep.subr.bf16.mxu0 0
        %740 = vmatpush1.bf16.xpose.msra.mxu0 0
        %741 = vmatprep.subr.bf16.mxu0 0
        %742 = vmatpush1.bf16.xpose.msra.mxu0 0
        %743 = vmatprep.subr.bf16.mxu0 0
        %744 = vmatpush1.bf16.xpose.msra.mxu0 0
        %745 = vmatprep.subr.bf16.mxu0 0
        %746 = vmatpush1.bf16.xpose.msra.mxu0 0
        %747 = vmatprep.subr.bf16.mxu0 0
        %748 = vmatpush1.bf16.xpose.msra.mxu0 0
        %749 = vmatprep.subr.bf16.mxu0 0
        %750 = vmatpush1.bf16.xpose.msra.mxu0 0
        %751 = vmatprep.subr.bf16.mxu0 0
        %752 = vmatpush1.bf16.xpose.msra.mxu0 0
        %753 = vmatprep.mubr.bf16.mxu0 0
        %754 = vmatmul.mubr.bf16.gmra.mrb[0].mxu0 %v652
        %v755 = vpop.f32.mrb[0].mxu0
        %v756 = vadd.f32 0.0, %v755
        %v757 = vpop.f32.mrb[0].mxu0
        %v758 = vpop.f32.mrb[0].mxu0
        %v759 = vpop.f32.mrb[0].mxu0
        %760 = vdwg.mxu0
        %761 = vmatprep.subr.bf16.mxu0 0
        %762 = vmatpush1.bf16.xpose.msra.mxu0 %v675
        %763 = vmatprep.subr.bf16.mxu0 0
        %764 = vmatpush1.bf16.xpose.msra.mxu0 0
        %765 = vmatprep.subr.bf16.mxu0 0
        %766 = vmatpush1.bf16.xpose.msra.mxu0 0
        %767 = vmatprep.subr.bf16.mxu0 0
        %768 = vmatpush1.bf16.xpose.msra.mxu0 0
        %769 = vmatprep.subr.bf16.mxu0 0
        %770 = vmatpush1.bf16.xpose.msra.mxu0 0
        %771 = vmatprep.subr.bf16.mxu0 0
        %772 = vmatpush1.bf16.xpose.msra.mxu0 0
        %773 = vmatprep.subr.bf16.mxu0 0
        %774 = vmatpush1.bf16.xpose.msra.mxu0 0
        %775 = vmatprep.subr.bf16.mxu0 0
        %776 = vmatpush1.bf16.xpose.msra.mxu0 0
        %777 = vmatprep.subr.bf16.mxu0 0
        %778 = vmatpush1.bf16.xpose.msra.mxu0 0
        %779 = vmatprep.subr.bf16.mxu0 0
        %780 = vmatpush1.bf16.xpose.msra.mxu0 0
        %781 = vmatprep.subr.bf16.mxu0 0
        %782 = vmatpush1.bf16.xpose.msra.mxu0 0
        %783 = vmatprep.subr.bf16.mxu0 0
        %784 = vmatpush1.bf16.xpose.msra.mxu0 0
        %785 = vmatprep.subr.bf16.mxu0 0
        %786 = vmatpush1.bf16.xpose.msra.mxu0 0
        %787 = vmatprep.subr.bf16.mxu0 0
        %788 = vmatpush1.bf16.xpose.msra.mxu0 0
        %789 = vmatprep.subr.bf16.mxu0 0
        %790 = vmatpush1.bf16.xpose.msra.mxu0 0
        %791 = vmatprep.subr.bf16.mxu0 0
        %792 = vmatpush1.bf16.xpose.msra.mxu0 0
        %793 = vmatprep.mubr.bf16.mxu0 0
        %794 = vmatmul.mubr.bf16.gmra.mrb[0].mxu0 %v653
        %v795 = vpop.f32.mrb[0].mxu0
        %v796 = vadd.f32 0.0, %v795
        %v797 = vpop.f32.mrb[0].mxu0
        %v798 = vpop.f32.mrb[0].mxu0
        %v799 = vpop.f32.mrb[0].mxu0
        %800 = vdwg.mxu0
        %801 = vmatprep.subr.bf16.mxu0 0
        %802 = vmatpush1.bf16.xpose.msra.mxu0 %v676
        %803 = vmatprep.subr.bf16.mxu0 0
        %804 = vmatpush1.bf16.xpose.msra.mxu0 0
        %805 = vmatprep.subr.bf16.mxu0 0
        %806 = vmatpush1.bf16.xpose.msra.mxu0 0
        %807 = vmatprep.subr.bf16.mxu0 0
        %808 = vmatpush1.bf16.xpose.msra.mxu0 0
        %809 = vmatprep.subr.bf16.mxu0 0
        %810 = vmatpush1.bf16.xpose.msra.mxu0 0
        %811 = vmatprep.subr.bf16.mxu0 0
        %812 = vmatpush1.bf16.xpose.msra.mxu0 0
        %813 = vmatprep.subr.bf16.mxu0 0
        %814 = vmatpush1.bf16.xpose.msra.mxu0 0
        %815 = vmatprep.subr.bf16.mxu0 0
        %816 = vmatpush1.bf16.xpose.msra.mxu0 0
        %817 = vmatprep.subr.bf16.mxu0 0
        %818 = vmatpush1.bf16.xpose.msra.mxu0 0
        %819 = vmatprep.subr.bf16.mxu0 0
        %820 = vmatpush1.bf16.xpose.msra.mxu0 0
        %821 = vmatprep.subr.bf16.mxu0 0
        %822 = vmatpush1.bf16.xpose.msra.mxu0 0
        %823 = vmatprep.subr.bf16.mxu0 0
        %824 = vmatpush1.bf16.xpose.msra.mxu0 0
        %825 = vmatprep.subr.bf16.mxu0 0
        %826 = vmatpush1.bf16.xpose.msra.mxu0 0
        %827 = vmatprep.subr.bf16.mxu0 0
        %828 = vmatpush1.bf16.xpose.msra.mxu0 0
        %829 = vmatprep.subr.bf16.mxu0 0
        %830 = vmatpush1.bf16.xpose.msra.mxu0 0
        %831 = vmatprep.subr.bf16.mxu0 0
        %832 = vmatpush1.bf16.xpose.msra.mxu0 0
        %833 = vmatprep.mubr.bf16.mxu0 0
        %834 = vmatmul.mubr.bf16.gmra.mrb[0].mxu0 %v654
        %v835 = vpop.f32.mrb[0].mxu0
        %v836 = vadd.f32 0.0, %v835
        %v837 = vpop.f32.mrb[0].mxu0
        %v838 = vpop.f32.mrb[0].mxu0
        %v839 = vpop.f32.mrb[0].mxu0
        %840 = vdwg.mxu0
        %v841 = vmul.f32 %v716, 0.125
        %v842 = vmul.f32 %v756, 0.125
        %v843 = vmul.f32 %v796, 0.125
        %v844 = vmul.f32 %v836, 0.125
        %v845 = vpack.c.bf16 %v841, %v841
        %v846 = vpack.c.bf16 %v842, %v842
        %v847 = vpack.c.bf16 %v843, %v843
        %v848 = vpack.c.bf16 %v844, %v844
        %vm849 = vcmask 64512
        %v851 = vsel %vm849, %v845, 0
        %vm853 = vcmask 1043456
        %v855 = vsel %vm853, %v677, 0
        %857 = vmatprep.subr.bf16.mxu0 0
        %858 = vmatpush1.bf16.msra.mxu0 %v855
        %859 = vmatprep.subr.bf16.mxu0 0
        %860 = vmatpush1.bf16.msra.mxu0 0
        %861 = vmatprep.subr.bf16.mxu0 0
        %862 = vmatpush1.bf16.msra.mxu0 0
        %863 = vmatprep.subr.bf16.mxu0 0
        %864 = vmatpush1.bf16.msra.mxu0 0
        %865 = vmatprep.subr.bf16.mxu0 0
        %866 = vmatpush1.bf16.msra.mxu0 0
        %867 = vmatprep.subr.bf16.mxu0 0
        %868 = vmatpush1.bf16.msra.mxu0 0
        %869 = vmatprep.subr.bf16.mxu0 0
        %870 = vmatpush1.bf16.msra.mxu0 0
        %871 = vmatprep.subr.bf16.mxu0 0
        %872 = vmatpush1.bf16.msra.mxu0 0
        %873 = vmatprep.subr.bf16.mxu0 0
        %874 = vmatpush1.bf16.msra.mxu0 0
        %875 = vmatprep.subr.bf16.mxu0 0
        %876 = vmatpush1.bf16.msra.mxu0 0
        %877 = vmatprep.subr.bf16.mxu0 0
        %878 = vmatpush1.bf16.msra.mxu0 0
        %879 = vmatprep.subr.bf16.mxu0 0
        %880 = vmatpush1.bf16.msra.mxu0 0
        %881 = vmatprep.subr.bf16.mxu0 0
        %882 = vmatpush1.bf16.msra.mxu0 0
        %883 = vmatprep.subr.bf16.mxu0 0
        %884 = vmatpush1.bf16.msra.mxu0 0
        %885 = vmatprep.subr.bf16.mxu0 0
        %886 = vmatpush1.bf16.msra.mxu0 0
        %887 = vmatprep.subr.bf16.mxu0 0
        %888 = vmatpush1.bf16.msra.mxu0 0
        %889 = vmatprep.mubr.bf16.mxu0 0
        %890 = vmatmul.mubr.bf16.gmra.mrb[0].mxu0 %v851
        %v891 = vpop.f32.mrb[0].mxu0
        %v892 = vadd.f32 0.0, %v891
        %v893 = vpop.f32.mrb[0].mxu0
        %v894 = vpop.f32.mrb[0].mxu0
        %v895 = vpop.f32.mrb[0].mxu0
        %896 = vdwg.mxu0
        %v898 = vsel %vm849, %v846, 0
        %v901 = vsel %vm853, %v678, 0
        %903 = vmatprep.subr.bf16.mxu0 0
        %904 = vmatpush1.bf16.msra.mxu0 %v901
        %905 = vmatprep.subr.bf16.mxu0 0
        %906 = vmatpush1.bf16.msra.mxu0 0
        %907 = vmatprep.subr.bf16.mxu0 0
        %908 = vmatpush1.bf16.msra.mxu0 0
        %909 = vmatprep.subr.bf16.mxu0 0
        %910 = vmatpush1.bf16.msra.mxu0 0
        %911 = vmatprep.subr.bf16.mxu0 0
        %912 = vmatpush1.bf16.msra.mxu0 0
        %913 = vmatprep.subr.bf16.mxu0 0
        %914 = vmatpush1.bf16.msra.mxu0 0
        %915 = vmatprep.subr.bf16.mxu0 0
        %916 = vmatpush1.bf16.msra.mxu0 0
        %917 = vmatprep.subr.bf16.mxu0 0
        %918 = vmatpush1.bf16.msra.mxu0 0
        %919 = vmatprep.subr.bf16.mxu0 0
        %920 = vmatpush1.bf16.msra.mxu0 0
        %921 = vmatprep.subr.bf16.mxu0 0
        %922 = vmatpush1.bf16.msra.mxu0 0
        %923 = vmatprep.subr.bf16.mxu0 0
        %924 = vmatpush1.bf16.msra.mxu0 0
        %925 = vmatprep.subr.bf16.mxu0 0
        %926 = vmatpush1.bf16.msra.mxu0 0
        %927 = vmatprep.subr.bf16.mxu0 0
        %928 = vmatpush1.bf16.msra.mxu0 0
        %929 = vmatprep.subr.bf16.mxu0 0
        %930 = vmatpush1.bf16.msra.mxu0 0
        %931 = vmatprep.subr.bf16.mxu0 0
        %932 = vmatpush1.bf16.msra.mxu0 0
        %933 = vmatprep.subr.bf16.mxu0 0
        %934 = vmatpush1.bf16.msra.mxu0 0
        %935 = vmatprep.mubr.bf16.mxu0 0
        %936 = vmatmul.mubr.bf16.gmra.mrb[0].mxu0 %v898
        %v937 = vpop.f32.mrb[0].mxu0
        %v938 = vadd.f32 0.0, %v937
        %v939 = vpop.f32.mrb[0].mxu0
        %v940 = vpop.f32.mrb[0].mxu0
        %v941 = vpop.f32.mrb[0].mxu0
        %942 = vdwg.mxu0
        %v944 = vsel %vm849, %v847, 0
        %v947 = vsel %vm853, %v679, 0
        %949 = vmatprep.subr.bf16.mxu0 0
        %950 = vmatpush1.bf16.msra.mxu0 %v947
        %951 = vmatprep.subr.bf16.mxu0 0
        %952 = vmatpush1.bf16.msra.mxu0 0
        %953 = vmatprep.subr.bf16.mxu0 0
        %954 = vmatpush1.bf16.msra.mxu0 0
        %955 = vmatprep.subr.bf16.mxu0 0
        %956 = vmatpush1.bf16.msra.mxu0 0
        %957 = vmatprep.subr.bf16.mxu0 0
        %958 = vmatpush1.bf16.msra.mxu0 0
        %959 = vmatprep.subr.bf16.mxu0 0
        %960 = vmatpush1.bf16.msra.mxu0 0
        %961 = vmatprep.subr.bf16.mxu0 0
        %962 = vmatpush1.bf16.msra.mxu0 0
        %963 = vmatprep.subr.bf16.mxu0 0
        %964 = vmatpush1.bf16.msra.mxu0 0
        %965 = vmatprep.subr.bf16.mxu0 0
        %966 = vmatpush1.bf16.msra.mxu0 0
        %967 = vmatprep.subr.bf16.mxu0 0
        %968 = vmatpush1.bf16.msra.mxu0 0
        %969 = vmatprep.subr.bf16.mxu0 0
        %970 = vmatpush1.bf16.msra.mxu0 0
        %971 = vmatprep.subr.bf16.mxu0 0
        %972 = vmatpush1.bf16.msra.mxu0 0
        %973 = vmatprep.subr.bf16.mxu0 0
        %974 = vmatpush1.bf16.msra.mxu0 0
        %975 = vmatprep.subr.bf16.mxu0 0
        %976 = vmatpush1.bf16.msra.mxu0 0
        %977 = vmatprep.subr.bf16.mxu0 0
        %978 = vmatpush1.bf16.msra.mxu0 0
        %979 = vmatprep.subr.bf16.mxu0 0
        %980 = vmatpush1.bf16.msra.mxu0 0
        %981 = vmatprep.mubr.bf16.mxu0 0
        %982 = vmatmul.mubr.bf16.gmra.mrb[0].mxu0 %v944
        %v983 = vpop.f32.mrb[0].mxu0
        %v984 = vadd.f32 0.0, %v983
        %v985 = vpop.f32.mrb[0].mxu0
        %v986 = vpop.f32.mrb[0].mxu0
        %v987 = vpop.f32.mrb[0].mxu0
        %988 = vdwg.mxu0
        %v990 = vsel %vm849, %v848, 0
        %v993 = vsel %vm853, %v680, 0
        %995 = vmatprep.subr.bf16.mxu0 0
        %996 = vmatpush1.bf16.msra.mxu0 %v993
        %997 = vmatprep.subr.bf16.mxu0 0
        %998 = vmatpush1.bf16.msra.mxu0 0
        %999 = vmatprep.subr.bf16.mxu0 0
        %1000 = vmatpush1.bf16.msra.mxu0 0
        %1001 = vmatprep.subr.bf16.mxu0 0
        %1002 = vmatpush1.bf16.msra.mxu0 0
        %1003 = vmatprep.subr.bf16.mxu0 0
        %1004 = vmatpush1.bf16.msra.mxu0 0
        %1005 = vmatprep.subr.bf16.mxu0 0
        %1006 = vmatpush1.bf16.msra.mxu0 0
        %1007 = vmatprep.subr.bf16.mxu0 0
        %1008 = vmatpush1.bf16.msra.mxu0 0
        %1009 = vmatprep.subr.bf16.mxu0 0
        %1010 = vmatpush1.bf16.msra.mxu0 0
        %1011 = vmatprep.subr.bf16.mxu0 0
        %1012 = vmatpush1.bf16.msra.mxu0 0
        %1013 = vmatprep.subr.bf16.mxu0 0
        %1014 = vmatpush1.bf16.msra.mxu0 0
        %1015 = vmatprep.subr.bf16.mxu0 0
        %1016 = vmatpush1.bf16.msra.mxu0 0
        %1017 = vmatprep.subr.bf16.mxu0 0
        %1018 = vmatpush1.bf16.msra.mxu0 0
        %1019 = vmatprep.subr.bf16.mxu0 0
        %1020 = vmatpush1.bf16.msra.mxu0 0
        %1021 = vmatprep.subr.bf16.mxu0 0
        %1022 = vmatpush1.bf16.msra.mxu0 0
        %1023 = vmatprep.subr.bf16.mxu0 0
        %1024 = vmatpush1.bf16.msra.mxu0 0
        %1025 = vmatprep.subr.bf16.mxu0 0
        %1026 = vmatpush1.bf16.msra.mxu0 0
        %1027 = vmatprep.mubr.bf16.mxu0 0
        %1028 = vmatmul.mubr.bf16.gmra.mrb[0].mxu0 %v990
        %v1029 = vpop.f32.mrb[0].mxu0
        %v1030 = vadd.f32 0.0, %v1029
        %v1031 = vpop.f32.mrb[0].mxu0
        %v1032 = vpop.f32.mrb[0].mxu0
        %v1033 = vpop.f32.mrb[0].mxu0
        %1034 = vdwg.mxu0
        %v1035 = vmul.bf16 %v637, %v672
        %v1036 = vmul.bf16 %v638, %v672
        %v1037 = vmul.bf16 %v639, %v672
        %v1038 = vmul.bf16 %v640, %v672
        %v1039 = vmul.bf16 %v623, %v672
        %v1040 = vmul.bf16 %v624, %v672
        %v1041 = vmul.bf16 %v625, %v672
        %v1042 = vmul.bf16 %v626, %v672
        %1043 = vmatprep.subr.bf16.mxu0 0
        %1044 = vmatpush1.bf16.xpose.msra.mxu0 %v1035
        %1045 = vmatprep.subr.bf16.mxu0 0
        %1046 = vmatpush1.bf16.xpose.msra.mxu0 0
        %1047 = vmatprep.subr.bf16.mxu0 0
        %1048 = vmatpush1.bf16.xpose.msra.mxu0 0
        %1049 = vmatprep.subr.bf16.mxu0 0
        %1050 = vmatpush1.bf16.xpose.msra.mxu0 0
        %1051 = vmatprep.subr.bf16.mxu0 0
        %1052 = vmatpush1.bf16.xpose.msra.mxu0 0
        %1053 = vmatprep.subr.bf16.mxu0 0
        %1054 = vmatpush1.bf16.xpose.msra.mxu0 0
        %1055 = vmatprep.subr.bf16.mxu0 0
        %1056 = vmatpush1.bf16.xpose.msra.mxu0 0
        %1057 = vmatprep.subr.bf16.mxu0 0
        %1058 = vmatpush1.bf16.xpose.msra.mxu0 0
        %1059 = vmatprep.subr.bf16.mxu0 0
        %1060 = vmatpush1.bf16.xpose.msra.mxu0 0
        %1061 = vmatprep.subr.bf16.mxu0 0
        %1062 = vmatpush1.bf16.xpose.msra.mxu0 0
        %1063 = vmatprep.subr.bf16.mxu0 0
        %1064 = vmatpush1.bf16.xpose.msra.mxu0 0
        %1065 = vmatprep.subr.bf16.mxu0 0
        %1066 = vmatpush1.bf16.xpose.msra.mxu0 0
        %1067 = vmatprep.subr.bf16.mxu0 0
        %1068 = vmatpush1.bf16.xpose.msra.mxu0 0
        %1069 = vmatprep.subr.bf16.mxu0 0
        %1070 = vmatpush1.bf16.xpose.msra.mxu0 0
        %1071 = vmatprep.subr.bf16.mxu0 0
        %1072 = vmatpush1.bf16.xpose.msra.mxu0 0
        %1073 = vmatprep.subr.bf16.mxu0 0
        %1074 = vmatpush1.bf16.xpose.msra.mxu0 0
        %1075 = vmatprep.mubr.bf16.mxu0 0
        %1076 = vmatmul.mubr.bf16.gmra.mrb[0].mxu0 %v651
        %v1077 = vpop.f32.mrb[0].mxu0
        %v1078 = vadd.f32 0.0, %v1077
        %v1079 = vpop.f32.mrb[0].mxu0
        %v1080 = vpop.f32.mrb[0].mxu0
        %v1081 = vpop.f32.mrb[0].mxu0
        %1082 = vdwg.mxu0
        %1083 = vmatprep.subr.bf16.mxu0 0
        %1084 = vmatpush1.bf16.xpose.msra.mxu0 %v1036
        %1085 = vmatprep.subr.bf16.mxu0 0
        %1086 = vmatpush1.bf16.xpose.msra.mxu0 0
        %1087 = vmatprep.subr.bf16.mxu0 0
        %1088 = vmatpush1.bf16.xpose.msra.mxu0 0
        %1089 = vmatprep.subr.bf16.mxu0 0
        %1090 = vmatpush1.bf16.xpose.msra.mxu0 0
        %1091 = vmatprep.subr.bf16.mxu0 0
        %1092 = vmatpush1.bf16.xpose.msra.mxu0 0
        %1093 = vmatprep.subr.bf16.mxu0 0
        %1094 = vmatpush1.bf16.xpose.msra.mxu0 0
        %1095 = vmatprep.subr.bf16.mxu0 0
        %1096 = vmatpush1.bf16.xpose.msra.mxu0 0
        %1097 = vmatprep.subr.bf16.mxu0 0
        %1098 = vmatpush1.bf16.xpose.msra.mxu0 0
        %1099 = vmatprep.subr.bf16.mxu0 0
        %1100 = vmatpush1.bf16.xpose.msra.mxu0 0
        %1101 = vmatprep.subr.bf16.mxu0 0
        %1102 = vmatpush1.bf16.xpose.msra.mxu0 0
        %1103 = vmatprep.subr.bf16.mxu0 0
        %1104 = vmatpush1.bf16.xpose.msra.mxu0 0
        %1105 = vmatprep.subr.bf16.mxu0 0
        %1106 = vmatpush1.bf16.xpose.msra.mxu0 0
        %1107 = vmatprep.subr.bf16.mxu0 0
        %1108 = vmatpush1.bf16.xpose.msra.mxu0 0
        %1109 = vmatprep.subr.bf16.mxu0 0
        %1110 = vmatpush1.bf16.xpose.msra.mxu0 0
        %1111 = vmatprep.subr.bf16.mxu0 0
        %1112 = vmatpush1.bf16.xpose.msra.mxu0 0
        %1113 = vmatprep.subr.bf16.mxu0 0
        %1114 = vmatpush1.bf16.xpose.msra.mxu0 0
        %1115 = vmatprep.mubr.bf16.mxu0 0
        %1116 = vmatmul.mubr.bf16.gmra.mrb[0].mxu0 %v652
        %v1117 = vpop.f32.mrb[0].mxu0
        %v1118 = vadd.f32 0.0, %v1117
        %v1119 = vpop.f32.mrb[0].mxu0
        %v1120 = vpop.f32.mrb[0].mxu0
        %v1121 = vpop.f32.mrb[0].mxu0
        %1122 = vdwg.mxu0
        %1123 = vmatprep.subr.bf16.mxu0 0
        %1124 = vmatpush1.bf16.xpose.msra.mxu0 %v1037
        %1125 = vmatprep.subr.bf16.mxu0 0
        %1126 = vmatpush1.bf16.xpose.msra.mxu0 0
        %1127 = vmatprep.subr.bf16.mxu0 0
        %1128 = vmatpush1.bf16.xpose.msra.mxu0 0
        %1129 = vmatprep.subr.bf16.mxu0 0
        %1130 = vmatpush1.bf16.xpose.msra.mxu0 0
        %1131 = vmatprep.subr.bf16.mxu0 0
        %1132 = vmatpush1.bf16.xpose.msra.mxu0 0
        %1133 = vmatprep.subr.bf16.mxu0 0
        %1134 = vmatpush1.bf16.xpose.msra.mxu0 0
        %1135 = vmatprep.subr.bf16.mxu0 0
        %1136 = vmatpush1.bf16.xpose.msra.mxu0 0
        %1137 = vmatprep.subr.bf16.mxu0 0
        %1138 = vmatpush1.bf16.xpose.msra.mxu0 0
        %1139 = vmatprep.subr.bf16.mxu0 0
        %1140 = vmatpush1.bf16.xpose.msra.mxu0 0
        %1141 = vmatprep.subr.bf16.mxu0 0
        %1142 = vmatpush1.bf16.xpose.msra.mxu0 0
        %1143 = vmatprep.subr.bf16.mxu0 0
        %1144 = vmatpush1.bf16.xpose.msra.mxu0 0
        %1145 = vmatprep.subr.bf16.mxu0 0
        %1146 = vmatpush1.bf16.xpose.msra.mxu0 0
        %1147 = vmatprep.subr.bf16.mxu0 0
        %1148 = vmatpush1.bf16.xpose.msra.mxu0 0
        %1149 = vmatprep.subr.bf16.mxu0 0
        %1150 = vmatpush1.bf16.xpose.msra.mxu0 0
        %1151 = vmatprep.subr.bf16.mxu0 0
        %1152 = vmatpush1.bf16.xpose.msra.mxu0 0
        %1153 = vmatprep.subr.bf16.mxu0 0
        %1154 = vmatpush1.bf16.xpose.msra.mxu0 0
        %1155 = vmatprep.mubr.bf16.mxu0 0
        %1156 = vmatmul.mubr.bf16.gmra.mrb[0].mxu0 %v653
        %v1157 = vpop.f32.mrb[0].mxu0
        %v1158 = vadd.f32 0.0, %v1157
        %v1159 = vpop.f32.mrb[0].mxu0
        %v1160 = vpop.f32.mrb[0].mxu0
        %v1161 = vpop.f32.mrb[0].mxu0
        %1162 = vdwg.mxu0
        %1163 = vmatprep.subr.bf16.mxu0 0
        %1164 = vmatpush1.bf16.xpose.msra.mxu0 %v1038
        %1165 = vmatprep.subr.bf16.mxu0 0
        %1166 = vmatpush1.bf16.xpose.msra.mxu0 0
        %1167 = vmatprep.subr.bf16.mxu0 0
        %1168 = vmatpush1.bf16.xpose.msra.mxu0 0
        %1169 = vmatprep.subr.bf16.mxu0 0
        %1170 = vmatpush1.bf16.xpose.msra.mxu0 0
        %1171 = vmatprep.subr.bf16.mxu0 0
        %1172 = vmatpush1.bf16.xpose.msra.mxu0 0
        %1173 = vmatprep.subr.bf16.mxu0 0
        %1174 = vmatpush1.bf16.xpose.msra.mxu0 0
        %1175 = vmatprep.subr.bf16.mxu0 0
        %1176 = vmatpush1.bf16.xpose.msra.mxu0 0
        %1177 = vmatprep.subr.bf16.mxu0 0
        %1178 = vmatpush1.bf16.xpose.msra.mxu0 0
        %1179 = vmatprep.subr.bf16.mxu0 0
        %1180 = vmatpush1.bf16.xpose.msra.mxu0 0
        %1181 = vmatprep.subr.bf16.mxu0 0
        %1182 = vmatpush1.bf16.xpose.msra.mxu0 0
        %1183 = vmatprep.subr.bf16.mxu0 0
        %1184 = vmatpush1.bf16.xpose.msra.mxu0 0
        %1185 = vmatprep.subr.bf16.mxu0 0
        %1186 = vmatpush1.bf16.xpose.msra.mxu0 0
        %1187 = vmatprep.subr.bf16.mxu0 0
        %1188 = vmatpush1.bf16.xpose.msra.mxu0 0
        %1189 = vmatprep.subr.bf16.mxu0 0
        %1190 = vmatpush1.bf16.xpose.msra.mxu0 0
        %1191 = vmatprep.subr.bf16.mxu0 0
        %1192 = vmatpush1.bf16.xpose.msra.mxu0 0
        %1193 = vmatprep.subr.bf16.mxu0 0
        %1194 = vmatpush1.bf16.xpose.msra.mxu0 0
        %1195 = vmatprep.mubr.bf16.mxu0 0
        %1196 = vmatmul.mubr.bf16.gmra.mrb[0].mxu0 %v654
        %v1197 = vpop.f32.mrb[0].mxu0
        %v1198 = vadd.f32 0.0, %v1197
        %v1199 = vpop.f32.mrb[0].mxu0
        %v1200 = vpop.f32.mrb[0].mxu0
        %v1201 = vpop.f32.mrb[0].mxu0
        %1202 = vdwg.mxu0
        %v1203 = vmul.f32 %v1078, 0.125
        %v1204 = vmul.f32 %v1118, 0.125
        %v1205 = vmul.f32 %v1158, 0.125
        %v1206 = vmul.f32 %v1198, 0.125
        %v1207 = vpack.c.bf16 %v1203, %v1203
        %v1208 = vpack.c.bf16 %v1204, %v1204
        %v1209 = vpack.c.bf16 %v1205, %v1205
        %v1210 = vpack.c.bf16 %v1206, %v1206
        %v1212 = vsel %vm849, %v1207, 0
        %v1215 = vsel %vm853, %v1039, 0
        %1217 = vmatprep.subr.bf16.mxu0 0
        %1218 = vmatpush1.bf16.msra.mxu0 %v1215
        %1219 = vmatprep.subr.bf16.mxu0 0
        %1220 = vmatpush1.bf16.msra.mxu0 0
        %1221 = vmatprep.subr.bf16.mxu0 0
        %1222 = vmatpush1.bf16.msra.mxu0 0
        %1223 = vmatprep.subr.bf16.mxu0 0
        %1224 = vmatpush1.bf16.msra.mxu0 0
        %1225 = vmatprep.subr.bf16.mxu0 0
        %1226 = vmatpush1.bf16.msra.mxu0 0
        %1227 = vmatprep.subr.bf16.mxu0 0
        %1228 = vmatpush1.bf16.msra.mxu0 0
        %1229 = vmatprep.subr.bf16.mxu0 0
        %1230 = vmatpush1.bf16.msra.mxu0 0
        %1231 = vmatprep.subr.bf16.mxu0 0
        %1232 = vmatpush1.bf16.msra.mxu0 0
        %1233 = vmatprep.subr.bf16.mxu0 0
        %1234 = vmatpush1.bf16.msra.mxu0 0
        %1235 = vmatprep.subr.bf16.mxu0 0
        %1236 = vmatpush1.bf16.msra.mxu0 0
        %1237 = vmatprep.subr.bf16.mxu0 0
        %1238 = vmatpush1.bf16.msra.mxu0 0
        %1239 = vmatprep.subr.bf16.mxu0 0
        %1240 = vmatpush1.bf16.msra.mxu0 0
        %1241 = vmatprep.subr.bf16.mxu0 0
        %1242 = vmatpush1.bf16.msra.mxu0 0
        %1243 = vmatprep.subr.bf16.mxu0 0
        %1244 = vmatpush1.bf16.msra.mxu0 0
        %1245 = vmatprep.subr.bf16.mxu0 0
        %1246 = vmatpush1.bf16.msra.mxu0 0
        %1247 = vmatprep.subr.bf16.mxu0 0
        %1248 = vmatpush1.bf16.msra.mxu0 0
        %1249 = vmatprep.mubr.bf16.mxu0 0
        %1250 = vmatmul.mubr.bf16.gmra.mrb[0].mxu0 %v1212
        %v1251 = vpop.f32.mrb[0].mxu0
        %v1252 = vadd.f32 0.0, %v1251
        %v1253 = vpop.f32.mrb[0].mxu0
        %v1254 = vpop.f32.mrb[0].mxu0
        %v1255 = vpop.f32.mrb[0].mxu0
        %1256 = vdwg.mxu0
        %v1258 = vsel %vm849, %v1208, 0
        %v1261 = vsel %vm853, %v1040, 0
        %1263 = vmatprep.subr.bf16.mxu0 0
        %1264 = vmatpush1.bf16.msra.mxu0 %v1261
        %1265 = vmatprep.subr.bf16.mxu0 0
        %1266 = vmatpush1.bf16.msra.mxu0 0
        %1267 = vmatprep.subr.bf16.mxu0 0
        %1268 = vmatpush1.bf16.msra.mxu0 0
        %1269 = vmatprep.subr.bf16.mxu0 0
        %1270 = vmatpush1.bf16.msra.mxu0 0
        %1271 = vmatprep.subr.bf16.mxu0 0
        %1272 = vmatpush1.bf16.msra.mxu0 0
        %1273 = vmatprep.subr.bf16.mxu0 0
        %1274 = vmatpush1.bf16.msra.mxu0 0
        %1275 = vmatprep.subr.bf16.mxu0 0
        %1276 = vmatpush1.bf16.msra.mxu0 0
        %1277 = vmatprep.subr.bf16.mxu0 0
        %1278 = vmatpush1.bf16.msra.mxu0 0
        %1279 = vmatprep.subr.bf16.mxu0 0
        %1280 = vmatpush1.bf16.msra.mxu0 0
        %1281 = vmatprep.subr.bf16.mxu0 0
        %1282 = vmatpush1.bf16.msra.mxu0 0
        %1283 = vmatprep.subr.bf16.mxu0 0
        %1284 = vmatpush1.bf16.msra.mxu0 0
        %1285 = vmatprep.subr.bf16.mxu0 0
        %1286 = vmatpush1.bf16.msra.mxu0 0
        %1287 = vmatprep.subr.bf16.mxu0 0
        %1288 = vmatpush1.bf16.msra.mxu0 0
        %1289 = vmatprep.subr.bf16.mxu0 0
        %1290 = vmatpush1.bf16.msra.mxu0 0
        %1291 = vmatprep.subr.bf16.mxu0 0
        %1292 = vmatpush1.bf16.msra.mxu0 0
        %1293 = vmatprep.subr.bf16.mxu0 0
        %1294 = vmatpush1.bf16.msra.mxu0 0
        %1295 = vmatprep.mubr.bf16.mxu0 0
        %1296 = vmatmul.mubr.bf16.gmra.mrb[0].mxu0 %v1258
        %v1297 = vpop.f32.mrb[0].mxu0
        %v1298 = vadd.f32 0.0, %v1297
        %v1299 = vpop.f32.mrb[0].mxu0
        %v1300 = vpop.f32.mrb[0].mxu0
        %v1301 = vpop.f32.mrb[0].mxu0
        %1302 = vdwg.mxu0
        %v1304 = vsel %vm849, %v1209, 0
        %v1307 = vsel %vm853, %v1041, 0
        %1309 = vmatprep.subr.bf16.mxu0 0
        %1310 = vmatpush1.bf16.msra.mxu0 %v1307
        %1311 = vmatprep.subr.bf16.mxu0 0
        %1312 = vmatpush1.bf16.msra.mxu0 0
        %1313 = vmatprep.subr.bf16.mxu0 0
        %1314 = vmatpush1.bf16.msra.mxu0 0
        %1315 = vmatprep.subr.bf16.mxu0 0
        %1316 = vmatpush1.bf16.msra.mxu0 0
        %1317 = vmatprep.subr.bf16.mxu0 0
        %1318 = vmatpush1.bf16.msra.mxu0 0
        %1319 = vmatprep.subr.bf16.mxu0 0
        %1320 = vmatpush1.bf16.msra.mxu0 0
        %1321 = vmatprep.subr.bf16.mxu0 0
        %1322 = vmatpush1.bf16.msra.mxu0 0
        %1323 = vmatprep.subr.bf16.mxu0 0
        %1324 = vmatpush1.bf16.msra.mxu0 0
        %1325 = vmatprep.subr.bf16.mxu0 0
        %1326 = vmatpush1.bf16.msra.mxu0 0
        %1327 = vmatprep.subr.bf16.mxu0 0
        %1328 = vmatpush1.bf16.msra.mxu0 0
        %1329 = vmatprep.subr.bf16.mxu0 0
        %1330 = vmatpush1.bf16.msra.mxu0 0
        %1331 = vmatprep.subr.bf16.mxu0 0
        %1332 = vmatpush1.bf16.msra.mxu0 0
        %1333 = vmatprep.subr.bf16.mxu0 0
        %1334 = vmatpush1.bf16.msra.mxu0 0
        %1335 = vmatprep.subr.bf16.mxu0 0
        %1336 = vmatpush1.bf16.msra.mxu0 0
        %1337 = vmatprep.subr.bf16.mxu0 0
        %1338 = vmatpush1.bf16.msra.mxu0 0
        %1339 = vmatprep.subr.bf16.mxu0 0
        %1340 = vmatpush1.bf16.msra.mxu0 0
        %1341 = vmatprep.mubr.bf16.mxu0 0
        %1342 = vmatmul.mubr.bf16.gmra.mrb[0].mxu0 %v1304
        %v1343 = vpop.f32.mrb[0].mxu0
        %v1344 = vadd.f32 0.0, %v1343
        %v1345 = vpop.f32.mrb[0].mxu0
        %v1346 = vpop.f32.mrb[0].mxu0
        %v1347 = vpop.f32.mrb[0].mxu0
        %1348 = vdwg.mxu0
        %v1350 = vsel %vm849, %v1210, 0
        %v1353 = vsel %vm853, %v1042, 0
        %1355 = vmatprep.subr.bf16.mxu0 0
        %1356 = vmatpush1.bf16.msra.mxu0 %v1353
        %1357 = vmatprep.subr.bf16.mxu0 0
        %1358 = vmatpush1.bf16.msra.mxu0 0
        %1359 = vmatprep.subr.bf16.mxu0 0
        %1360 = vmatpush1.bf16.msra.mxu0 0
        %1361 = vmatprep.subr.bf16.mxu0 0
        %1362 = vmatpush1.bf16.msra.mxu0 0
        %1363 = vmatprep.subr.bf16.mxu0 0
        %1364 = vmatpush1.bf16.msra.mxu0 0
        %1365 = vmatprep.subr.bf16.mxu0 0
        %1366 = vmatpush1.bf16.msra.mxu0 0
        %1367 = vmatprep.subr.bf16.mxu0 0
        %1368 = vmatpush1.bf16.msra.mxu0 0
        %1369 = vmatprep.subr.bf16.mxu0 0
        %1370 = vmatpush1.bf16.msra.mxu0 0
        %1371 = vmatprep.subr.bf16.mxu0 0
        %1372 = vmatpush1.bf16.msra.mxu0 0
        %1373 = vmatprep.subr.bf16.mxu0 0
        %1374 = vmatpush1.bf16.msra.mxu0 0
        %1375 = vmatprep.subr.bf16.mxu0 0
        %1376 = vmatpush1.bf16.msra.mxu0 0
        %1377 = vmatprep.subr.bf16.mxu0 0
        %1378 = vmatpush1.bf16.msra.mxu0 0
        %1379 = vmatprep.subr.bf16.mxu0 0
        %1380 = vmatpush1.bf16.msra.mxu0 0
        %1381 = vmatprep.subr.bf16.mxu0 0
        %1382 = vmatpush1.bf16.msra.mxu0 0
        %1383 = vmatprep.subr.bf16.mxu0 0
        %1384 = vmatpush1.bf16.msra.mxu0 0
        %1385 = vmatprep.subr.bf16.mxu0 0
        %1386 = vmatpush1.bf16.msra.mxu0 0
        %1387 = vmatprep.mubr.bf16.mxu0 0
        %1388 = vmatmul.mubr.bf16.gmra.mrb[0].mxu0 %v1350
        %v1389 = vpop.f32.mrb[0].mxu0
        %v1390 = vadd.f32 0.0, %v1389
        %v1391 = vpop.f32.mrb[0].mxu0
        %v1392 = vpop.f32.mrb[0].mxu0
        %v1393 = vpop.f32.mrb[0].mxu0
        %1394 = vdwg.mxu0
        %v1395 = vadd.f32 %v892, %v1252
        %v1396 = vadd.f32 %v938, %v1298
        %v1397 = vadd.f32 %v984, %v1344
        %v1398 = vadd.f32 %v1030, %v1390
        %v1399 = vld [vmem:[#allocation3] sm:$0xff]
        %v1400 = vld [vmem:[#allocation3 + $0x8] sm:$0xff]
        %v1401 = vld [vmem:[#allocation3 + $0x10] sm:$0xff]
        %v1402 = vld [vmem:[#allocation3 + $0x18] sm:$0xff]
        %v1403 = vsub.f32 %v1395, %v1399
        %v1404 = vsub.f32 %v1396, %v1400
        %v1405 = vsub.f32 %v1397, %v1401
        %v1406 = vsub.f32 %v1398, %v1402
        %v1407 = vmul.f32 %v1403, 0.5
        %v1408 = vmul.f32 %v1404, 0.5
        %v1409 = vmul.f32 %v1405, 0.5
        %v1410 = vmul.f32 %v1406, 0.5
        %v1411 = vadd.f32 %v1399, %v1407
        %v1412 = vadd.f32 %v1400, %v1408
        %v1413 = vadd.f32 %v1401, %v1409
        %v1414 = vadd.f32 %v1402, %v1410
        %vm1415 = vcmp.ge.f32.partialorder %v1411, 0.5
        %vm1416 = vcmp.ge.f32.partialorder %v1412, 0.5
        %vm1417 = vcmp.ge.f32.partialorder %v1413, 0.5
        %vm1418 = vcmp.ge.f32.partialorder %v1414, 0.5
        %v1419 = vsel %vm1415, 0.0, %v1411
        %v1420 = vsel %vm1416, 0.0, %v1412
        %v1421 = vsel %vm1417, 0.0, %v1413
        %v1422 = vsel %vm1418, 0.0, %v1414
        %1423 = vst [vmem:[#allocation3] sm:$0xff] %v1419
        %1424 = vst [vmem:[#allocation3 + $0x8] sm:$0xff] %v1420
        %1425 = vst [vmem:[#allocation3 + $0x10] sm:$0xff] %v1421
        %1426 = vst [vmem:[#allocation3 + $0x18] sm:$0xff] %v1422
        %v1427 = vsel %vm1415, 1, 0
        %v1428 = vsel %vm1416, 1, 0
        %v1429 = vsel %vm1417, 1, 0
        %v1430 = vsel %vm1418, 1, 0
        %v1431 = vcvt.s32.f32 %v1427
        %v1432 = vcvt.s32.f32 %v1428
        %v1433 = vcvt.s32.f32 %v1429
        %v1434 = vcvt.s32.f32 %v1430
        %v1435 = vpack.c.bf16 %v1432, %v1431
        %v1436 = vpack.c.bf16 %v1434, %v1433
        %v1437 = vld [vmem:[%s3] sm:$0xf]
        %v1438 = vld [vmem:[%s3 + $0x4] sm:$0xf]
        %v1439 = vld [vmem:[%s3 + $0x8] sm:$0xf]
        %v1440 = vld [vmem:[%s3 + $0xc] sm:$0xf]
        %v1441 = vld [vmem:[%s4] sm:$0xff]
        %v1442 = vld [vmem:[%s4 + $0x8] sm:$0xff]
        %v1443 = vld [vmem:[%s4 + $0x10] sm:$0xff]
        %v1444 = vld [vmem:[%s4 + $0x18] sm:$0xff]
        %1446 = vset.pattern.permute.xlu0 0
        %1447 = vperm.xlu0 %1446, %v1441
        %v1448 = vpop.permute.xlu0 %1447
        %1451 = vset.pattern.permute.xlu0 0
        %1452 = vperm.xlu0 %1451, %v1442
        %v1453 = vpop.permute.xlu0 %1452
        %1456 = vset.pattern.permute.xlu0 0
        %1457 = vperm.xlu0 %1456, %v1443
        %v1458 = vpop.permute.xlu0 %1457
        %1461 = vset.pattern.permute.xlu0 0
        %1462 = vperm.xlu0 %1461, %v1444
        %v1463 = vpop.permute.xlu0 %1462
        %v1469 = vunpack.c.l.b16 %v1437
        %v1470 = vunpack.c.l.b16 %v1438
        %v1471 = vunpack.c.l.b16 %v1439
        %v1472 = vunpack.c.l.b16 %v1440
        %v1473 = vpack.c.b16 %v1470, %v1469
        %v1474 = vpack.c.b16 %v1472, %v1471
        %v1476 = vsel %vm403, %v1473, 0
        %v1479 = vsel %vm403, %v1474, 0
        %1481 = vmatprep.subr.bf16.mxu0 0
        %1482 = vmatpush1.bf16.msra.mxu0 %v1435
        %1483 = vmatprep.subr.bf16.mxu0 0
        %1484 = vmatpush1.bf16.msra.mxu0 %v1436
        %1485 = vmatprep.subr.bf16.mxu0 0
        %1486 = vmatpush1.bf16.msra.mxu0 0
        %1487 = vmatprep.subr.bf16.mxu0 0
        %1488 = vmatpush1.bf16.msra.mxu0 0
        %1489 = vmatprep.subr.bf16.mxu0 0
        %1490 = vmatpush1.bf16.msra.mxu0 0
        %1491 = vmatprep.subr.bf16.mxu0 0
        %1492 = vmatpush1.bf16.msra.mxu0 0
        %1493 = vmatprep.subr.bf16.mxu0 0
        %1494 = vmatpush1.bf16.msra.mxu0 0
        %1495 = vmatprep.subr.bf16.mxu0 0
        %1496 = vmatpush1.bf16.msra.mxu0 0
        %1497 = vmatprep.subr.bf16.mxu0 0
        %1498 = vmatpush1.bf16.msra.mxu0 0
        %1499 = vmatprep.subr.bf16.mxu0 0
        %1500 = vmatpush1.bf16.msra.mxu0 0
        %1501 = vmatprep.subr.bf16.mxu0 0
        %1502 = vmatpush1.bf16.msra.mxu0 0
        %1503 = vmatprep.subr.bf16.mxu0 0
        %1504 = vmatpush1.bf16.msra.mxu0 0
        %1505 = vmatprep.subr.bf16.mxu0 0
        %1506 = vmatpush1.bf16.msra.mxu0 0
        %1507 = vmatprep.subr.bf16.mxu0 0
        %1508 = vmatpush1.bf16.msra.mxu0 0
        %1509 = vmatprep.subr.bf16.mxu0 0
        %1510 = vmatpush1.bf16.msra.mxu0 0
        %1511 = vmatprep.subr.bf16.mxu0 0
        %1512 = vmatpush1.bf16.msra.mxu0 0
        %1513 = vmatprep.mubr.bf16.mxu0 0
        %1514 = vmatmul.mubr.bf16.gmra.mrb[0].mxu0 %v1476
        %v1515 = vpop.f32.mrb[0].mxu0
        %v1516 = vadd.f32 %v1448, %v1515
        %v1517 = vpop.f32.mrb[0].mxu0
        %v1518 = vpop.f32.mrb[0].mxu0
        %v1519 = vadd.f32 %v1453, %v1518
        %v1520 = vpop.f32.mrb[0].mxu0
        %1521 = vmatprep.mubr.bf16.mxu0 0
        %1522 = vmatmul.mubr.bf16.gmra.mrb[0].mxu0 %v1479
        %v1523 = vpop.f32.mrb[0].mxu0
        %v1524 = vadd.f32 %v1458, %v1523
        %v1525 = vpop.f32.mrb[0].mxu0
        %v1526 = vpop.f32.mrb[0].mxu0
        %v1527 = vadd.f32 %v1463, %v1526
        %v1528 = vpop.f32.mrb[0].mxu0
        %1529 = vdwg.mxu0
        %v1530 = vld [vmem:[#allocation4] sm:$0xff]
        %v1531 = vld [vmem:[#allocation4 + $0x8] sm:$0xff]
        %v1532 = vld [vmem:[#allocation4 + $0x10] sm:$0xff]
        %v1533 = vld [vmem:[#allocation4 + $0x18] sm:$0xff]
        %v1534 = vsub.f32 %v1516, %v1530
        %v1535 = vsub.f32 %v1519, %v1531
        %v1536 = vsub.f32 %v1524, %v1532
        %v1537 = vsub.f32 %v1527, %v1533
        %v1538 = vmul.f32 %v1534, 0.5
        %v1539 = vmul.f32 %v1535, 0.5
        %v1540 = vmul.f32 %v1536, 0.5
        %v1541 = vmul.f32 %v1537, 0.5
        %v1542 = vadd.f32 %v1530, %v1538
        %v1543 = vadd.f32 %v1531, %v1539
        %v1544 = vadd.f32 %v1532, %v1540
        %v1545 = vadd.f32 %v1533, %v1541
        %vm1546 = vcmp.ge.f32.partialorder %v1542, 1.0
        %vm1547 = vcmp.ge.f32.partialorder %v1543, 1.0
        %vm1548 = vcmp.ge.f32.partialorder %v1544, 1.0
        %vm1549 = vcmp.ge.f32.partialorder %v1545, 1.0
        %v1550 = vsel %vm1546, 0.0, %v1542
        %v1551 = vsel %vm1547, 0.0, %v1543
        %v1552 = vsel %vm1548, 0.0, %v1544
        %v1553 = vsel %vm1549, 0.0, %v1545
        %1554 = vst [vmem:[#allocation4] sm:$0xff] %v1550
        %1555 = vst [vmem:[#allocation4 + $0x8] sm:$0xff] %v1551
        %1556 = vst [vmem:[#allocation4 + $0x10] sm:$0xff] %v1552
        %1557 = vst [vmem:[#allocation4 + $0x18] sm:$0xff] %v1553
        %v1558 = vsel %vm1546, 1, 0
        %v1559 = vsel %vm1547, 1, 0
        %v1560 = vsel %vm1548, 1, 0
        %v1561 = vsel %vm1549, 1, 0
        %v1562 = vcvt.s32.f32 %v1558
        %v1563 = vcvt.s32.f32 %v1559
        %v1564 = vcvt.s32.f32 %v1560
        %v1565 = vcvt.s32.f32 %v1561
        %v1566 = vpack.c.bf16 %v1563, %v1562
        %v1567 = vpack.c.bf16 %v1565, %v1564
        %v1570 = vunpack.c.l.b16 %v1566
        %v1571 = vunpack.c.h.b16 %v1566
        %v1572 = vunpack.c.l.b16 %v1567
        %v1573 = vunpack.c.h.b16 %v1567
        %v1574 = vpack.c.b16 %v1570, %v1570
        %v1575 = vpack.c.b16 %v1571, %v1571
        %v1576 = vpack.c.b16 %v1572, %v1572
        %v1577 = vpack.c.b16 %v1573, %v1573
        %1582 = vst [vmem:[%s239] sm:$0xf] %v1574
        %1583 = vst [vmem:[%s239 + $0x4] sm:$0xf] %v1575
        %1584 = vst [vmem:[%s239 + $0x8] sm:$0xf] %v1576
        %1585 = vst [vmem:[%s239 + $0xc] sm:$0xf] %v1577
        %s1586 = sand.u32 %s153, 1
        %s1587 = scalar_lea.sflag [#allocation6], %s1586
        %s1588 = sand.u32 %s153, 1
        %s1589 = smul.addr %s1588, 16
        %s1590 = scalar_lea.vmem [#allocation5], %s1589
        // Predicated region
        $region45: #{tpu_custom_call.1} parent=39 // pred_check
          %p1591 = pneg %p163
        $region46: #{tpu_custom_call.1} parent=39 // pred_check_branch
          %1593 = sbr.rel (%p1591) target = $region48
        $region47: #{tpu_custom_call.1} parent=39 // pred_region
          %s1595 = ssub.s32 256, 256
          %1596 = vsyncadd %s1587, %s1595
          %s1597 = smul.addr %s24, 4
          %s1598 = sadd.s32 %s23, %s1597
          %s1599 = smul.addr %s1598, 64
          %s1600 = scalar_lea.hbm %s5, %s1599
          %s1601 = sshll.u32 %s1590, 4
          %s1602 = int_to_ptr.vmem [resolvable:$true] %s1601
          %1607 = dma.vmem_to_hbm [thread:$0]  %s1602, 256, %s1600, %s1587, 64, 64, 4
        $region48: #{tpu_custom_call.1} parent=39 // pred_fallthru
          _
      $region40: #{tpu_custom_call.1} parent=5 // pred_fallthru
        _
      %p1608 = scmp.le.s32.totalorder 2, %s14
      // Predicated region
      $region49: #{tpu_custom_call.1} parent=5 // pred_check
        %p1609 = pneg %p1608
      $region50: #{tpu_custom_call.1} parent=5 // pred_check_branch
        %1611 = sbr.rel (%p1609) target = $region52
      $region51: #{tpu_custom_call.1} parent=5 // pred_region
        %s1612 = ssub.s32 %s14, 2
        // Predicated region
        $region53: #{tpu_custom_call.1} parent=51 // pred_check
          %p1613 = pneg %p169
        $region54: #{tpu_custom_call.1} parent=51 // pred_check_branch
          %1615 = sbr.rel (%p1613) target = $region56
        $region55: #{tpu_custom_call.1} parent=51 // pred_region
          %s1616 = sand.u32 %s154, 1
          %s1617 = scalar_lea.sflag [#allocation6], %s1616
          %s1618 = sand.u32 %s154, 1
          %s1619 = smul.addr %s1618, 16
          %s1620 = scalar_lea.vmem [#allocation5], %s1619
          %1621 = dma.done %s1617, 256
        $region56: #{tpu_custom_call.1} parent=51 // pred_fallthru
          _
      $region52: #{tpu_custom_call.1} parent=5 // pred_fallthru
        _
    $region6: #{tpu_custom_call.1} parent=1 // loop_footer
      %s18 = sadd.s32 1, %s14
    $region7: #{tpu_custom_call.1} parent=1 // loop_footer_branch
      %13 = sbr.rel target = $region3
    $region8: #{tpu_custom_call.1} parent=1 // loop_exit
      _
    %1622 = vsyncpa [#allocation6], 1
    %s1623 = scalar_lea.sflag [#allocation6], 1
    %1624 = vsyncpa %s1623, 1

</llo_original>
